<compile_context>
chip_gen: v6e
topology: v6e:2x2x1
jax: 0.10.0
libtpu: 0.0.40
codegen_flags: <defaults>
</compile_context>

<pallas_src>
import functools

import jax
import jax.numpy as jnp
import numpy as np
from jax import lax
from jax.experimental import pallas as pl
from jax.experimental.pallas import tpu as pltpu

# TODO(synk): main_utils.select_seed is an external, data-dependent CPU routine (walks
# between annotated action points).  Approximated here as: a frame is a background seed
# iff it has no action annotation and its (masked) background score >= BKG_THRESH.
BKG_THRESH = 0.95

_N_BISECT = 26                       # f32 threshold-bisection steps (precision ~1.5e-8)
_VMEM_LIMIT = 64 * 1024 * 1024       # explicit scoped-VMEM cap (v7x discipline)


def _clamped_log(x):
    # torch.nn.BCELoss clamps log terms at -100.
    return jnp.maximum(jnp.log(x), -100.0)


# ----------------------------------------------------------------------------
# Kernel A: per-FPN-level video score (top-k mean / all mean mixing), fused
# across levels in a single pallas_call.  Top-k via k-th-value bisection.
# ----------------------------------------------------------------------------
def _vid_score_kernel(starts_ref, lens_ref, ks_ref,
                      cas_ref, mask_ref, lbl_ref, out_ref):
    # cas_ref : (B, C, T) sigmoid action-class scores, time on lanes
    # mask_ref: (B, 1, T) valid mask
    # lbl_ref : (B, C)    video-level labels
    # out_ref : (1, B, C) vid_score for this FPN level
    lvl = pl.program_id(0)
    start = starts_ref[lvl]
    length = lens_ref[lvl]
    k_act = ks_ref[lvl]

    cas = cas_ref[...]
    B, C, T = cas.shape

    # (1,1,T) window mask folded into the valid mask once (no (B,C,T) int32 iota).
    t_idx = lax.broadcasted_iota(jnp.int32, (1, 1, T), 2)
    win = ((t_idx >= start) & (t_idx < start + length)).astype(jnp.float32)
    scores = cas * (mask_ref[...] * win)            # zero outside window / mask

    len_f = jnp.maximum(length, 1).astype(jnp.float32)
    k_f = jnp.maximum(k_act, 1).astype(jnp.float32)

    mean_all = jnp.sum(scores, axis=2, keepdims=True) / len_f        # (B, C, 1)

    # k-th-value bisection on [0, 1] (sigmoid range).  Cost is independent of k:
    # _N_BISECT unrolled count-reductions instead of O(k) max-extractions.
    def body(_, carry):
        lo, hi = carry
        mid = 0.5 * (lo + hi)
        cnt = jnp.sum(jnp.where(scores >= mid, 1.0, 0.0), axis=2, keepdims=True)
        ge_k = cnt >= k_f
        return jnp.where(ge_k, mid, lo), jnp.where(ge_k, hi, mid)

    lo0 = jnp.zeros((B, C, 1), jnp.float32)
    hi0 = jnp.ones((B, C, 1), jnp.float32)
    thr, _ = lax.fori_loop(0, _N_BISECT, body, (lo0, hi0), unroll=True)

    # Sum of top-k = sum of elements strictly above the k-th value + tie correction.
    above = jnp.where(scores > thr, 1.0, 0.0)
    cnt_gt = jnp.sum(above, axis=2, keepdims=True)
    sum_gt = jnp.sum(scores * above, axis=2, keepdims=True)
    mean_topk = (sum_gt + (k_f - cnt_gt) * thr) / k_f                 # (B, C, 1)

    lbl = lbl_ref[...]                                                # (B, C)
    out_ref[0] = mean_topk[:, :, 0] * lbl + mean_all[:, :, 0] * (1.0 - lbl)


def vid_scores_all_levels(cas_act_t, mask_t, vid_labels, starts, lens, ks):
    B, C, T = cas_act_t.shape
    L = int(starts.shape[0])
    grid_spec = pltpu.PrefetchScalarGridSpec(
        num_scalar_prefetch=3,
        grid=(L,),
        in_specs=[
            # Constant block indices -> arrays are DMA'd once, reused across levels.
            pl.BlockSpec((B, C, T), lambda l, s, n, k: (0, 0, 0)),
            pl.BlockSpec((B, 1, T), lambda l, s, n, k: (0, 0, 0)),
            pl.BlockSpec((B, C), lambda l, s, n, k: (0, 0)),
        ],
        out_specs=pl.BlockSpec((1, B, C), lambda l, s, n, k: (l, 0, 0)),
    )
    return pl.pallas_call(
        _vid_score_kernel,
        out_shape=jax.ShapeDtypeStruct((L, B, C), jnp.float32),
        grid_spec=grid_spec,
        compiler_params=pltpu.CompilerParams(
            dimension_semantics=("parallel",),
            vmem_limit_bytes=_VMEM_LIMIT),
    )(starts, lens, ks, cas_act_t, mask_t, vid_labels)


# ----------------------------------------------------------------------------
# Kernel B: frame-level focal-weighted BCE (action + background terms),
# batch-parallel and time-tiled with a resident (4,1) scratch accumulator.
# ----------------------------------------------------------------------------
def _frame_loss_kernel(cas_ref, gt_ref, mask_ref, out_ref, acc_ref, *, num_cls):
    # cas_ref : (1, C+1, Tt) fused sigmoid scores (one batch row, one time tile)
    # gt_ref  : (1, C,   Tt) point annotations
    # mask_ref: (1, 1,   Tt)
    # out_ref : (1, 4, 1)    [loss_act_num, num_act, loss_bkg_num, num_bkg]
    # acc_ref : (4, 1) f32 VMEM scratch, resident across time tiles
    t_tile = pl.program_id(1)

    @pl.when(t_tile == 0)
    def _():
        acc_ref[...] = jnp.zeros_like(acc_ref)

    m = mask_ref[...]
    cfm = cas_ref[...] * m                           # cas_sigmoid_fuse_masked (1,C+1,Tt)
    pam = gt_ref[...] * m                            # point_anno_masked (1,C,Tt)
    cfm_b = cfm[:, num_cls:, :]                      # background channel (1,1,Tt)

    w_act = jnp.max(pam, axis=1, keepdims=True)      # (1,1,Tt) action-frame weight
    # TODO(synk): main_utils.select_seed approximation (see BKG_THRESH above).
    bkg_seed = jnp.where((w_act < 0.5) & (cfm_b >= BKG_THRESH), 1.0, 0.0)

    # Binary targets -> one clamped log per channel.
    #   action channels: target = point annotation (valid for both terms, since at
    #   background-seed frames all action annotations are zero);
    #   background channel: target = bkg_seed (0 at action frames, 1 at bkg frames).
    target = jnp.concatenate([pam, bkg_seed], axis=1)            # (1,C+1,Tt)
    arg = jnp.where(target > 0.5, cfm, 1.0 - cfm)
    elem = (1.0 - arg) ** 2 * (-_clamped_log(arg))               # focal * BCE
    per_frame = jnp.sum(elem, axis=1, keepdims=True)             # (1,1,Tt)

    # All four per-step statistics as one MXU matmul against a ones vector
    # (MXU is otherwise idle here; keeps the XLU free for the channel max/sum).
    rows = jnp.concatenate([(per_frame * w_act)[0],
                            w_act[0],
                            (per_frame * bkg_seed)[0],
                            bkg_seed[0]], axis=0)                # (4, Tt)
    ones = jnp.ones((rows.shape[1], 1), jnp.float32)
    acc_ref[...] += jnp.dot(rows, ones,
                            preferred_element_type=jnp.float32,
                            precision=lax.Precision.HIGHEST)

    @pl.when(t_tile == pl.num_programs(1) - 1)
    def _():
        out_ref[0] = acc_ref[...]


def _pick_time_tile(T):
    # Lane-dense, pipelined time tiles (capped at 1024 to bound live temporaries).
    for cand in (1024, 512, 256, 128):
        if T % cand == 0:
            return cand
    return T


def frame_loss_stats(cas_fuse_t, gt_t, mask_t):
    B, C1, T = cas_fuse_t.shape
    C = C1 - 1
    tt = _pick_time_tile(T)
    n_t = T // tt
    kern = functools.partial(_frame_loss_kernel, num_cls=C)
    return pl.pallas_call(
        kern,
        out_shape=jax.ShapeDtypeStruct((B, 4, 1), jnp.float32),
        grid=(B, n_t),
        in_specs=[
            pl.BlockSpec((1, C1, tt), lambda b, t: (b, 0, t)),
            pl.BlockSpec((1, C, tt), lambda b, t: (b, 0, t)),
            pl.BlockSpec((1, 1, tt), lambda b, t: (b, 0, t)),
        ],
        out_specs=pl.BlockSpec((1, 4, 1), lambda b, t: (b, 0, 0)),
        scratch_shapes=[pltpu.VMEM((4, 1), jnp.float32)],
        compiler_params=pltpu.CompilerParams(
            dimension_semantics=("parallel", "arbitrary"),
            vmem_limit_bytes=_VMEM_LIMIT),
    )(cas_fuse_t, gt_t, mask_t)


# ----------------------------------------------------------------------------
# Wrapper replicating Total_loss.forward
# ----------------------------------------------------------------------------
def total_loss(cas_sigmoid_fuse, cas_sigmoid, valid_mask, gt_cls, vid_labels,
               fpn_intervals, r_act):
    f32 = jnp.float32
    B, T, C1 = cas_sigmoid_fuse.shape
    C = C1 - 1

    # One-time relayout: time -> lane (last) dim, classes -> sublanes.
    # TODO(synk): ideally produce these in [B, C(+1), T] layout upstream to avoid the
    # transpose copies entirely.
    cas_act_t = jnp.transpose(cas_sigmoid[:, :, :C].astype(f32), (0, 2, 1))   # (B, C,  T)
    cas_fuse_t = jnp.transpose(cas_sigmoid_fuse.astype(f32), (0, 2, 1))       # (B, C1, T)
    gt_t = jnp.transpose(gt_cls.astype(f32), (0, 2, 1))                       # (B, C,  T)
    mask_t = valid_mask.astype(f32)[:, None, :]                               # (B, 1,  T)
    lbl = vid_labels.astype(f32)                                              # (B, C)

    # Pad T to a multiple of 128 for lane-dense tiles; padded frames carry mask 0 and
    # lie outside every FPN window, so every statistic is unchanged.
    T_pad = ((T + 127) // 128) * 128
    if T_pad != T:
        pad = ((0, 0), (0, 0), (0, T_pad - T))
        cas_act_t = jnp.pad(cas_act_t, pad)
        cas_fuse_t = jnp.pad(cas_fuse_t, pad)
        gt_t = jnp.pad(gt_t, pad)
        mask_t = jnp.pad(mask_t, pad)

    starts = jnp.asarray([s for s, _ in fpn_intervals], jnp.int32)
    lens = jnp.asarray([e - s for s, e in fpn_intervals], jnp.int32)
    ks = jnp.asarray([max((e - s) // r_act, 1) for s, e in fpn_intervals], jnp.int32)

    # ----- video-level loss (all FPN levels in one fused kernel) -----
    vid_scores_lvl = vid_scores_all_levels(cas_act_t, mask_t, lbl,
                                           starts, lens, ks)                  # (L, B, C)
    vid_scores = jnp.mean(vid_scores_lvl, axis=0)                             # (B, C)
    bce_vid = -(lbl * _clamped_log(vid_scores)
                + (1.0 - lbl) * _clamped_log(1.0 - vid_scores))
    loss_vid = jnp.mean(bce_vid)

    # ----- frame-level losses -----
    stats = frame_loss_stats(cas_fuse_t, gt_t, mask_t)[:, :, 0]               # (B, 4)
    loss_act_num = stats[:, 0]
    num_act = stats[:, 1]
    loss_bkg_num = stats[:, 2]
    num_bkg = stats[:, 3]
    num_act = jnp.where(num_act == 0.0, 1.0, num_act)
    num_bkg = jnp.where(num_bkg == 0.0, 1.0, num_bkg)
    loss_frame = jnp.mean(loss_act_num / num_act)
    loss_frame_bkg = jnp.mean(loss_bkg_num / num_bkg)

    return loss_vid, loss_frame, loss_frame_bkg


# ----------------------------------------------------------------------------
# Pure-JAX reference (mirrors the PyTorch module, same bkg-seed approximation)
# ----------------------------------------------------------------------------
def _ref_total_loss(cas_sigmoid_fuse, cas_sigmoid, valid_mask, gt_cls, vid_labels,
                    fpn_intervals, r_act):
    f32 = jnp.float32
    cas_sigmoid_fuse = cas_sigmoid_fuse.astype(f32)
    cas_sigmoid = cas_sigmoid.astype(f32)
    valid_mask = valid_mask.astype(f32)
    gt_cls = gt_cls.astype(f32)
    vid_labels = vid_labels.astype(f32)

    cls_scores = cas_sigmoid[:, :, :-1] * valid_mask[:, :, None]
    vs = []
    for (s, e) in fpn_intervals:
        lvl = cls_scores[:, s:e, :]
        k = max(lvl.shape[1] // r_act, 1)
        srt = jnp.flip(jnp.sort(lvl, axis=1), axis=1)
        mean_topk = jnp.mean(srt[:, :k, :], axis=1)
        mean_all = jnp.mean(lvl, axis=1)
        vs.append(mean_topk * vid_labels + mean_all * (1.0 - vid_labels))
    vid_scores = jnp.mean(jnp.stack(vs, axis=-1), axis=-1)
    loss_vid = jnp.mean(-(vid_labels * _clamped_log(vid_scores)
                          + (1.0 - vid_labels) * _clamped_log(1.0 - vid_scores)))

    B, T, C = gt_cls.shape
    pa = jnp.concatenate([gt_cls, jnp.zeros((B, T, 1), f32)], axis=2)
    pam = pa * valid_mask[:, :, None]
    cfm = cas_sigmoid_fuse * valid_mask[:, :, None]
    log_p = _clamped_log(cfm)
    log_1mp = _clamped_log(1.0 - cfm)

    w_act = jnp.max(pam, axis=2, keepdims=True)
    num_act = jnp.sum(w_act[:, :, 0], axis=1)
    num_act = jnp.where(num_act == 0.0, 1.0, num_act)
    focal_a = ((1.0 - cfm) * pam + cfm * (1.0 - pam)) ** 2
    bce_a = -(pam * log_p + (1.0 - pam) * log_1mp)
    loss_frame = jnp.mean(
        jnp.sum(jnp.sum(focal_a * bce_a * w_act, axis=2), axis=1) / num_act)

    bkg_score = cfm[:, :, -1:]
    bkg_seed = ((w_act < 0.5) & (bkg_score >= BKG_THRESH)).astype(f32)
    num_bkg = jnp.sum(bkg_seed[:, :, 0], axis=1)
    num_bkg = jnp.where(num_bkg == 0.0, 1.0, num_bkg)
    pbkg = jnp.zeros_like(pa).at[:, :, -1].set(1.0)
    focal_b = ((1.0 - cfm) * pbkg + cfm * (1.0 - pbkg)) ** 2
    bce_b = -(pbkg * log_p + (1.0 - pbkg) * log_1mp)
    loss_frame_bkg = jnp.mean(
        jnp.sum(jnp.sum(focal_b * bce_b * bkg_seed, axis=2), axis=1) / num_bkg)

    return loss_vid, loss_frame, loss_frame_bkg


if __name__ == "__main__":
    loss_fn = jax.jit(total_loss, static_argnames=("fpn_intervals", "r_act"))

    def run_case(B, T, C, fpn_intervals, r_act, seed):
        C1 = C + 1
        key = jax.random.PRNGKey(seed)
        k1, k2, k3, k4 = jax.random.split(key, 4)
        cas_sigmoid_fuse = jax.nn.sigmoid(3.0 * jax.random.normal(k1, (B, T, C1)))
        cas_sigmoid = jax.nn.sigmoid(3.0 * jax.random.normal(k2, (B, T, C1)))
        valid_mask = (jax.random.uniform(k3, (B, T)) < 0.9).astype(jnp.float32)
        gt_cls = (jax.random.uniform(k4, (B, T, C)) < 0.2).astype(jnp.float32)
        vid_labels = (jnp.sum(gt_cls, axis=1) > 0).astype(jnp.float32)

        losses = jax.block_until_ready(
            loss_fn(cas_sigmoid_fuse, cas_sigmoid, valid_mask, gt_cls, vid_labels,
                    fpn_intervals=fpn_intervals, r_act=r_act))
        ref = _ref_total_loss(cas_sigmoid_fuse, cas_sigmoid, valid_mask, gt_cls,
                              vid_labels, fpn_intervals, r_act)
        np.testing.assert_allclose(np.asarray(losses, dtype=np.float32),
                                   np.asarray(ref, dtype=np.float32),
                                   rtol=1e-3, atol=1e-3)
        assert np.all(np.isfinite(np.asarray(losses, dtype=np.float32)))

    # Small case (exercises the T-padding path: T=16 padded to 128).
    run_case(B=2, T=16, C=4, fpn_intervals=((0, 8), (8, 16)), r_act=2, seed=0)
    # Larger case: multi-time-tile accumulation path and top-k with k up to 128.
    run_case(B=2, T=2048, C=4,
             fpn_intervals=((0, 1024), (1024, 1536), (1536, 1792), (1792, 2048)),
             r_act=8, seed=1)

    print("KERNEL_OK")
</pallas_src>

<mosaic_0001>
module attributes {stable_mosaic.version = 11 : i64} {
  func.func @_frame_loss_kernel(%arg0: i32, %arg1: i32, %arg2: memref<1x5x128xf32, #tpu.memory_space<vmem>>, %arg3: memref<1x4x128xf32, #tpu.memory_space<vmem>>, %arg4: memref<1x1x128xf32, #tpu.memory_space<vmem>>, %arg5: memref<1x4x1xf32, #tpu.memory_space<vmem>>, %arg6: memref<4x1xf32, #tpu.memory_space<vmem>>) attributes {dimension_semantics = [#tpu.dimension_semantics<parallel>, #tpu.dimension_semantics<arbitrary>], iteration_bounds = array<i64: 2, 1>, scalar_prefetch = 0 : i64, scratch_operands = 1 : i64, tpu.core_type = #tpu.core_type<tc>, window_params = [{transform_indices = @transform_0, window_bounds = array<i64: 1, 5, 128>}, {transform_indices = @transform_1, window_bounds = array<i64: 1, 4, 128>}, {transform_indices = @transform_2, window_bounds = array<i64: 1, 1, 128>}, {transform_indices = @transform_3, window_bounds = array<i64: 1, 4, 1>}]} {
    %c0_i32 = arith.constant 0 : i32
    %0 = arith.cmpi eq, %arg1, %c0_i32 : i32
    %1 = arith.extui %0 : i1 to i32
    %c0_i32_0 = arith.constant 0 : i32
    %2 = arith.cmpi ne, %1, %c0_i32_0 : i32
    scf.if %2 {
      %cst_27 = arith.constant 0.000000e+00 : f32
      %53 = vector.broadcast %cst_27 : f32 to vector<4x1xf32>
      %c0_28 = arith.constant 0 : index
      %c0_29 = arith.constant 0 : index
      %54 = vector.load %arg6[%c0_28, %c0_29] : memref<4x1xf32, #tpu.memory_space<vmem>>, vector<4x1xf32>
      tpu.vector_store %arg6[%c0_28, %c0_29], %53 {strides = array<i32>} : memref<4x1xf32, #tpu.memory_space<vmem>>, vector<4x1xf32>,
    } else {
    }
    %c0 = arith.constant 0 : index
    %c0_1 = arith.constant 0 : index
    %c0_2 = arith.constant 0 : index
    %3 = vector.load %arg4[%c0, %c0_1, %c0_2] : memref<1x1x128xf32, #tpu.memory_space<vmem>>, vector<1x1x128xf32>
    %c0_3 = arith.constant 0 : index
    %c0_4 = arith.constant 0 : index
    %c0_5 = arith.constant 0 : index
    %4 = vector.load %arg2[%c0_3, %c0_4, %c0_5] : memref<1x5x128xf32, #tpu.memory_space<vmem>>, vector<1x5x128xf32>
    %5 = vector.broadcast %3 : vector<1x1x128xf32> to vector<1x5x128xf32>
    %6 = arith.mulf %4, %5 : vector<1x5x128xf32>
    %c0_6 = arith.constant 0 : index
    %c0_7 = arith.constant 0 : index
    %c0_8 = arith.constant 0 : index
    %7 = vector.load %arg3[%c0_6, %c0_7, %c0_8] : memref<1x4x128xf32, #tpu.memory_space<vmem>>, vector<1x4x128xf32>
    %8 = vector.broadcast %3 : vector<1x1x128xf32> to vector<1x4x128xf32>
    %9 = arith.mulf %7, %8 : vector<1x4x128xf32>
    %10 = vector.extract_strided_slice %6 {offsets = [0, 4, 0], sizes = [1, 1, 128], strides = [1, 1, 1]} : vector<1x5x128xf32> to vector<1x1x128xf32>
    %cst = arith.constant dense<0xFF800000> : vector<1x128xf32>
    %11 = vector.multi_reduction <maximumf>, %9, %cst [1] : vector<1x4x128xf32> to vector<1x128xf32>
    %12 = vector.shape_cast %11 : vector<1x128xf32> to vector<1x1x128xf32>
    %cst_9 = arith.constant 5.000000e-01 : f32
    %13 = vector.broadcast %cst_9 : f32 to vector<1x1x128xf32>
    %14 = arith.cmpf olt, %12, %13 : vector<1x1x128xf32>
    %cst_10 = arith.constant 0.949999988 : f32
    %15 = vector.broadcast %cst_10 : f32 to vector<1x1x128xf32>
    %16 = arith.cmpf oge, %10, %15 : vector<1x1x128xf32>
    %17 = arith.andi %14, %16 : vector<1x1x128xi1>
    %cst_11 = arith.constant 1.000000e+00 : f32
    %cst_12 = arith.constant 0.000000e+00 : f32
    %18 = vector.broadcast %cst_11 : f32 to vector<1x1x128xf32>
    %19 = vector.broadcast %cst_12 : f32 to vector<1x1x128xf32>
    %20 = arith.select %17, %18, %19 : vector<1x1x128xi1>, vector<1x1x128xf32>
    %21 = tpu.concatenate %9, %20 in 1 : vector<1x4x128xf32>, vector<1x1x128xf32> -> vector<1x5x128xf32>
    %cst_13 = arith.constant 5.000000e-01 : f32
    %22 = vector.broadcast %cst_13 : f32 to vector<1x5x128xf32>
    %23 = arith.cmpf ogt, %21, %22 : vector<1x5x128xf32>
    %cst_14 = arith.constant 1.000000e+00 : f32
    %24 = vector.broadcast %cst_14 : f32 to vector<1x5x128xf32>
    %25 = arith.subf %24, %6 : vector<1x5x128xf32>
    %26 = arith.select %23, %6, %25 : vector<1x5x128xi1>, vector<1x5x128xf32>
    %cst_15 = arith.constant 1.000000e+00 : f32
    %27 = vector.broadcast %cst_15 : f32 to vector<1x5x128xf32>
    %28 = arith.subf %27, %26 : vector<1x5x128xf32>
    %29 = arith.mulf %28, %28 : vector<1x5x128xf32>
    %30 = math.log %26 : vector<1x5x128xf32>
    %cst_16 = arith.constant -1.000000e+02 : f32
    %31 = vector.broadcast %cst_16 : f32 to vector<1x5x128xf32>
    %32 = arith.maximumf %30, %31 : vector<1x5x128xf32>
    %cst_17 = arith.constant 0.000000e+00 : f32
    %33 = vector.broadcast %cst_17 : f32 to vector<1x5x128xf32>
    %34 = arith.subf %33, %32 : vector<1x5x128xf32>
    %35 = arith.mulf %29, %34 : vector<1x5x128xf32>
    %cst_18 = arith.constant dense<0.000000e+00> : vector<1x128xf32>
    %36 = vector.multi_reduction <add>, %35, %cst_18 [1] : vector<1x5x128xf32> to vector<1x128xf32>
    %37 = vector.shape_cast %36 : vector<1x128xf32> to vector<1x1x128xf32>
    %38 = arith.mulf %37, %12 : vector<1x1x128xf32>
    %39 = vector.shape_cast %38 : vector<1x1x128xf32> to vector<1x128xf32>
    %40 = vector.shape_cast %12 : vector<1x1x128xf32> to vector<1x128xf32>
    %41 = arith.mulf %37, %20 : vector<1x1x128xf32>
    %42 = vector.shape_cast %41 : vector<1x1x128xf32> to vector<1x128xf32>
    %43 = vector.shape_cast %20 : vector<1x1x128xf32> to vector<1x128xf32>
    %44 = tpu.concatenate %39, %40, %42, %43 in 0 : vector<1x128xf32>, vector<1x128xf32>, vector<1x128xf32>, vector<1x128xf32> -> vector<4x128xf32>
    %cst_19 = arith.constant 1.000000e+00 : f32
    %45 = vector.broadcast %cst_19 : f32 to vector<128x1xf32>
    %c0_20 = arith.constant 0 : index
    %c0_21 = arith.constant 0 : index
    %46 = vector.load %arg6[%c0_20, %c0_21] : memref<4x1xf32, #tpu.memory_space<vmem>>, vector<4x1xf32>
    %cst_22 = arith.constant dense<0.000000e+00> : vector<4x1xf32>
    %47 = tpu.matmul %44, %45, %cst_22 {dimension_numbers = #tpu.dot_dimension_numbers<[1], [0], [0], [1], [0, 0, 1, 1], [], []>, precision = #tpu.contract_precision<fp32>} : vector<4x128xf32>, vector<128x1xf32>, vector<4x1xf32> -> vector<4x1xf32>
    %48 = arith.addf %46, %47 : vector<4x1xf32>
    %c0_23 = arith.constant 0 : index
    %c0_24 = arith.constant 0 : index
    %49 = vector.load %arg6[%c0_23, %c0_24] : memref<4x1xf32, #tpu.memory_space<vmem>>, vector<4x1xf32>
    tpu.vector_store %arg6[%c0_23, %c0_24], %48 {strides = array<i32>} : memref<4x1xf32, #tpu.memory_space<vmem>>, vector<4x1xf32>,
    %c0_i32_25 = arith.constant 0 : i32
    %50 = arith.cmpi eq, %arg1, %c0_i32_25 : i32
    %51 = arith.extui %50 : i1 to i32
    %c0_i32_26 = arith.constant 0 : i32
    %52 = arith.cmpi ne, %51, %c0_i32_26 : i32
    scf.if %52 {
      %c0_27 = arith.constant 0 : index
      %c0_28 = arith.constant 0 : index
      %53 = vector.load %arg6[%c0_27, %c0_28] : memref<4x1xf32, #tpu.memory_space<vmem>>, vector<4x1xf32>
      %c0_29 = arith.constant 0 : index
      %c0_30 = arith.constant 0 : index
      %c0_31 = arith.constant 0 : index
      %54 = vector.load %arg5[%c0_29, %c0_30, %c0_31] : memref<1x4x1xf32, #tpu.memory_space<vmem>>, vector<1x4x1xf32>
      %55 = vector.shape_cast %54 : vector<1x4x1xf32> to vector<4x1xf32>
      %56 = vector.shape_cast %53 : vector<4x1xf32> to vector<1x4x1xf32>
      tpu.vector_store %arg5[%c0_29, %c0_30, %c0_31], %56 {strides = array<i32>} : memref<1x4x1xf32, #tpu.memory_space<vmem>>, vector<1x4x1xf32>,
    } else {
    }
    return
  }
  func.func @transform_0(%arg0: i32, %arg1: i32) -> (i32, i32, i32) {
    %c0_i32 = arith.constant 0 : i32
    %c0_i32_0 = arith.constant 0 : i32
    return %arg0, %c0_i32, %arg1 : i32, i32, i32
  }
  func.func @transform_1(%arg0: i32, %arg1: i32) -> (i32, i32, i32) {
    %c0_i32 = arith.constant 0 : i32
    %c0_i32_0 = arith.constant 0 : i32
    return %arg0, %c0_i32, %arg1 : i32, i32, i32
  }
  func.func @transform_2(%arg0: i32, %arg1: i32) -> (i32, i32, i32) {
    %c0_i32 = arith.constant 0 : i32
    %c0_i32_0 = arith.constant 0 : i32
    return %arg0, %c0_i32, %arg1 : i32, i32, i32
  }
  func.func @transform_3(%arg0: i32, %arg1: i32) -> (i32, i32, i32) {
    %c0_i32 = arith.constant 0 : i32
    %c0_i32_0 = arith.constant 0 : i32
    %c0_i32_1 = arith.constant 0 : i32
    return %arg0, %c0_i32, %c0_i32_0 : i32, i32, i32
  }
}

module attributes {stable_mosaic.version = 11 : i64} {
  func.func @_vid_score_kernel(%arg0: i32, %arg1: memref<2xi32, #tpu.memory_space<smem>>, %arg2: memref<2xi32, #tpu.memory_space<smem>>, %arg3: memref<2xi32, #tpu.memory_space<smem>>, %arg4: memref<2x4x128xf32, #tpu.memory_space<vmem>>, %arg5: memref<2x1x128xf32, #tpu.memory_space<vmem>>, %arg6: memref<2x4xf32, #tpu.memory_space<vmem>>, %arg7: memref<1x2x4xf32, #tpu.memory_space<vmem>>) attributes {dimension_semantics = [#tpu.dimension_semantics<parallel>], iteration_bounds = array<i64: 2>, scalar_prefetch = 3 : i64, scratch_operands = 0 : i64, tpu.core_type = #tpu.core_type<tc>, window_params = [{pipeline_mode = #tpu.pipeline_mode<synchronous>, transform_indices = @transform_0, window_bounds = array<i64: 2, 4, 128>}, {pipeline_mode = #tpu.pipeline_mode<synchronous>, transform_indices = @transform_1, window_bounds = array<i64: 2, 1, 128>}, {pipeline_mode = #tpu.pipeline_mode<synchronous>, transform_indices = @transform_2, window_bounds = array<i64: 2, 4>}, {transform_indices = @transform_3, window_bounds = array<i64: 1, 2, 4>}]} {
    %0 = arith.index_cast %arg0 : i32 to index
    %1 = memref.load %arg1[%0] : memref<2xi32, #tpu.memory_space<smem>>
    %2 = arith.index_cast %arg0 : i32 to index
    %3 = memref.load %arg2[%2] : memref<2xi32, #tpu.memory_space<smem>>
    %4 = arith.index_cast %arg0 : i32 to index
    %5 = memref.load %arg3[%4] : memref<2xi32, #tpu.memory_space<smem>>
    %c0 = arith.constant 0 : index
    %c0_0 = arith.constant 0 : index
    %c0_1 = arith.constant 0 : index
    %6 = vector.load %arg4[%c0, %c0_0, %c0_1] : memref<2x4x128xf32, #tpu.memory_space<vmem>>, vector<2x4x128xf32>
    %7 = tpu.iota {dimensions = array<i32: 2>} : vector<1x1x128xi32>
    %8 = vector.broadcast %1 : i32 to vector<1x1x128xi32>
    %9 = arith.cmpi sge, %7, %8 : vector<1x1x128xi32>
    %10 = arith.addi %1, %3 : i32
    %11 = vector.broadcast %10 : i32 to vector<1x1x128xi32>
    %12 = arith.cmpi slt, %7, %11 : vector<1x1x128xi32>
    %13 = arith.andi %9, %12 : vector<1x1x128xi1>
    %14 = arith.extui %13 : vector<1x1x128xi1> to vector<1x1x128xi32>
    %15 = arith.sitofp %14 : vector<1x1x128xi32> to vector<1x1x128xf32>
    %c0_2 = arith.constant 0 : index
    %c0_3 = arith.constant 0 : index
    %c0_4 = arith.constant 0 : index
    %16 = vector.load %arg5[%c0_2, %c0_3, %c0_4] : memref<2x1x128xf32, #tpu.memory_space<vmem>>, vector<2x1x128xf32>
    %17 = vector.broadcast %15 : vector<1x1x128xf32> to vector<2x1x128xf32>
    %18 = arith.mulf %16, %17 : vector<2x1x128xf32>
    %19 = vector.broadcast %18 : vector<2x1x128xf32> to vector<2x4x128xf32>
    %20 = arith.mulf %6, %19 : vector<2x4x128xf32>
    %c1_i32 = arith.constant 1 : i32
    %21 = arith.maxsi %3, %c1_i32 : i32
    %22 = arith.sitofp %21 : i32 to f32
    %c1_i32_5 = arith.constant 1 : i32
    %23 = arith.maxsi %5, %c1_i32_5 : i32
    %24 = arith.sitofp %23 : i32 to f32
    %cst = arith.constant dense<0.000000e+00> : vector<2x4xf32>
    %25 = vector.multi_reduction <add>, %20, %cst [2] : vector<2x4x128xf32> to vector<2x4xf32>
    %26 = vector.shape_cast %25 : vector<2x4xf32> to vector<2x4x1xf32>
    %27 = vector.broadcast %22 : f32 to vector<2x4x1xf32>
    %28 = arith.divf %26, %27 : vector<2x4x1xf32>
    %cst_6 = arith.constant 0.000000e+00 : f32
    %29 = vector.broadcast %cst_6 : f32 to vector<2x4x1xf32>
    %cst_7 = arith.constant 1.000000e+00 : f32
    %30 = vector.broadcast %cst_7 : f32 to vector<2x4x1xf32>
    %c0_i32 = arith.constant 0 : i32
    %31 = arith.addf %29, %30 : vector<2x4x1xf32>
    %cst_8 = arith.constant 5.000000e-01 : f32
    %32 = vector.broadcast %cst_8 : f32 to vector<2x4x1xf32>
    %33 = arith.mulf %32, %31 : vector<2x4x1xf32>
    %34 = vector.broadcast %33 : vector<2x4x1xf32> to vector<2x4x128xf32>
    %35 = arith.cmpf oge, %20, %34 : vector<2x4x128xf32>
    %cst_9 = arith.constant 1.000000e+00 : f32
    %cst_10 = arith.constant 0.000000e+00 : f32
    %36 = vector.broadcast %cst_9 : f32 to vector<2x4x128xf32>
    %37 = vector.broadcast %cst_10 : f32 to vector<2x4x128xf32>
    %38 = arith.select %35, %36, %37 : vector<2x4x128xi1>, vector<2x4x128xf32>
    %cst_11 = arith.constant dense<0.000000e+00> : vector<2x4xf32>
    %39 = vector.multi_reduction <add>, %38, %cst_11 [2] : vector<2x4x128xf32> to vector<2x4xf32>
    %40 = vector.shape_cast %39 : vector<2x4xf32> to vector<2x4x1xf32>
    %41 = vector.broadcast %24 : f32 to vector<2x4x1xf32>
    %42 = arith.cmpf oge, %40, %41 : vector<2x4x1xf32>
    %43 = arith.select %42, %33, %29 : vector<2x4x1xi1>, vector<2x4x1xf32>
    %44 = arith.select %42, %30, %33 : vector<2x4x1xi1>, vector<2x4x1xf32>
    %c1_i32_12 = arith.constant 1 : i32
    %45 = arith.addf %43, %44 : vector<2x4x1xf32>
    %cst_13 = arith.constant 5.000000e-01 : f32
    %46 = vector.broadcast %cst_13 : f32 to vector<2x4x1xf32>
    %47 = arith.mulf %46, %45 : vector<2x4x1xf32>
    %48 = vector.broadcast %47 : vector<2x4x1xf32> to vector<2x4x128xf32>
    %49 = arith.cmpf oge, %20, %48 : vector<2x4x128xf32>
    %cst_14 = arith.constant 1.000000e+00 : f32
    %cst_15 = arith.constant 0.000000e+00 : f32
    %50 = vector.broadcast %cst_14 : f32 to vector<2x4x128xf32>
    %51 = vector.broadcast %cst_15 : f32 to vector<2x4x128xf32>
    %52 = arith.select %49, %50, %51 : vector<2x4x128xi1>, vector<2x4x128xf32>
    %cst_16 = arith.constant dense<0.000000e+00> : vector<2x4xf32>
    %53 = vector.multi_reduction <add>, %52, %cst_16 [2] : vector<2x4x128xf32> to vector<2x4xf32>
    %54 = vector.shape_cast %53 : vector<2x4xf32> to vector<2x4x1xf32>
    %55 = vector.broadcast %24 : f32 to vector<2x4x1xf32>
    %56 = arith.cmpf oge, %54, %55 : vector<2x4x1xf32>
    %57 = arith.select %56, %47, %43 : vector<2x4x1xi1>, vector<2x4x1xf32>
    %58 = arith.select %56, %44, %47 : vector<2x4x1xi1>, vector<2x4x1xf32>
    %c2_i32 = arith.constant 2 : i32
    %59 = arith.addf %57, %58 : vector<2x4x1xf32>
    %cst_17 = arith.constant 5.000000e-01 : f32
    %60 = vector.broadcast %cst_17 : f32 to vector<2x4x1xf32>
    %61 = arith.mulf %60, %59 : vector<2x4x1xf32>
    %62 = vector.broadcast %61 : vector<2x4x1xf32> to vector<2x4x128xf32>
    %63 = arith.cmpf oge, %20, %62 : vector<2x4x128xf32>
    %cst_18 = arith.constant 1.000000e+00 : f32
    %cst_19 = arith.constant 0.000000e+00 : f32
    %64 = vector.broadcast %cst_18 : f32 to vector<2x4x128xf32>
    %65 = vector.broadcast %cst_19 : f32 to vector<2x4x128xf32>
    %66 = arith.select %63, %64, %65 : vector<2x4x128xi1>, vector<2x4x128xf32>
    %cst_20 = arith.constant dense<0.000000e+00> : vector<2x4xf32>
    %67 = vector.multi_reduction <add>, %66, %cst_20 [2] : vector<2x4x128xf32> to vector<2x4xf32>
    %68 = vector.shape_cast %67 : vector<2x4xf32> to vector<2x4x1xf32>
    %69 = vector.broadcast %24 : f32 to vector<2x4x1xf32>
    %70 = arith.cmpf oge, %68, %69 : vector<2x4x1xf32>
    %71 = arith.select %70, %61, %57 : vector<2x4x1xi1>, vector<2x4x1xf32>
    %72 = arith.select %70, %58, %61 : vector<2x4x1xi1>, vector<2x4x1xf32>
    %c3_i32 = arith.constant 3 : i32
    %73 = arith.addf %71, %72 : vector<2x4x1xf32>
    %cst_21 = arith.constant 5.000000e-01 : f32
    %74 = vector.broadcast %cst_21 : f32 to vector<2x4x1xf32>
    %75 = arith.mulf %74, %73 : vector<2x4x1xf32>
    %76 = vector.broadcast %75 : vector<2x4x1xf32> to vector<2x4x128xf32>
    %77 = arith.cmpf oge, %20, %76 : vector<2x4x128xf32>
    %cst_22 = arith.constant 1.000000e+00 : f32
    %cst_23 = arith.constant 0.000000e+00 : f32
    %78 = vector.broadcast %cst_22 : f32 to vector<2x4x128xf32>
    %79 = vector.broadcast %cst_23 : f32 to vector<2x4x128xf32>
    %80 = arith.select %77, %78, %79 : vector<2x4x128xi1>, vector<2x4x128xf32>
    %cst_24 = arith.constant dense<0.000000e+00> : vector<2x4xf32>
    %81 = vector.multi_reduction <add>, %80, %cst_24 [2] : vector<2x4x128xf32> to vector<2x4xf32>
    %82 = vector.shape_cast %81 : vector<2x4xf32> to vector<2x4x1xf32>
    %83 = vector.broadcast %24 : f32 to vector<2x4x1xf32>
    %84 = arith.cmpf oge, %82, %83 : vector<2x4x1xf32>
    %85 = arith.select %84, %75, %71 : vector<2x4x1xi1>, vector<2x4x1xf32>
    %86 = arith.select %84, %72, %75 : vector<2x4x1xi1>, vector<2x4x1xf32>
    %c4_i32 = arith.constant 4 : i32
    %87 = arith.addf %85, %86 : vector<2x4x1xf32>
    %cst_25 = arith.constant 5.000000e-01 : f32
    %88 = vector.broadcast %cst_25 : f32 to vector<2x4x1xf32>
    %89 = arith.mulf %88, %87 : vector<2x4x1xf32>
    %90 = vector.broadcast %89 : vector<2x4x1xf32> to vector<2x4x128xf32>
    %91 = arith.cmpf oge, %20, %90 : vector<2x4x128xf32>
    %cst_26 = arith.constant 1.000000e+00 : f32
    %cst_27 = arith.constant 0.000000e+00 : f32
    %92 = vector.broadcast %cst_26 : f32 to vector<2x4x128xf32>
    %93 = vector.broadcast %cst_27 : f32 to vector<2x4x128xf32>
    %94 = arith.select %91, %92, %93 : vector<2x4x128xi1>, vector<2x4x128xf32>
    %cst_28 = arith.constant dense<0.000000e+00> : vector<2x4xf32>
    %95 = vector.multi_reduction <add>, %94, %cst_28 [2] : vector<2x4x128xf32> to vector<2x4xf32>
    %96 = vector.shape_cast %95 : vector<2x4xf32> to vector<2x4x1xf32>
    %97 = vector.broadcast %24 : f32 to vector<2x4x1xf32>
    %98 = arith.cmpf oge, %96, %97 : vector<2x4x1xf32>
    %99 = arith.select %98, %89, %85 : vector<2x4x1xi1>, vector<2x4x1xf32>
    %100 = arith.select %98, %86, %89 : vector<2x4x1xi1>, vector<2x4x1xf32>
    %c5_i32 = arith.constant 5 : i32
    %101 = arith.addf %99, %100 : vector<2x4x1xf32>
    %cst_29 = arith.constant 5.000000e-01 : f32
    %102 = vector.broadcast %cst_29 : f32 to vector<2x4x1xf32>
    %103 = arith.mulf %102, %101 : vector<2x4x1xf32>
    %104 = vector.broadcast %103 : vector<2x4x1xf32> to vector<2x4x128xf32>
    %105 = arith.cmpf oge, %20, %104 : vector<2x4x128xf32>
    %cst_30 = arith.constant 1.000000e+00 : f32
    %cst_31 = arith.constant 0.000000e+00 : f32
    %106 = vector.broadcast %cst_30 : f32 to vector<2x4x128xf32>
    %107 = vector.broadcast %cst_31 : f32 to vector<2x4x128xf32>
    %108 = arith.select %105, %106, %107 : vector<2x4x128xi1>, vector<2x4x128xf32>
    %cst_32 = arith.constant dense<0.000000e+00> : vector<2x4xf32>
    %109 = vector.multi_reduction <add>, %108, %cst_32 [2] : vector<2x4x128xf32> to vector<2x4xf32>
    %110 = vector.shape_cast %109 : vector<2x4xf32> to vector<2x4x1xf32>
    %111 = vector.broadcast %24 : f32 to vector<2x4x1xf32>
    %112 = arith.cmpf oge, %110, %111 : vector<2x4x1xf32>
    %113 = arith.select %112, %103, %99 : vector<2x4x1xi1>, vector<2x4x1xf32>
    %114 = arith.select %112, %100, %103 : vector<2x4x1xi1>, vector<2x4x1xf32>
    %c6_i32 = arith.constant 6 : i32
    %115 = arith.addf %113, %114 : vector<2x4x1xf32>
    %cst_33 = arith.constant 5.000000e-01 : f32
    %116 = vector.broadcast %cst_33 : f32 to vector<2x4x1xf32>
    %117 = arith.mulf %116, %115 : vector<2x4x1xf32>
    %118 = vector.broadcast %117 : vector<2x4x1xf32> to vector<2x4x128xf32>
    %119 = arith.cmpf oge, %20, %118 : vector<2x4x128xf32>
    %cst_34 = arith.constant 1.000000e+00 : f32
    %cst_35 = arith.constant 0.000000e+00 : f32
    %120 = vector.broadcast %cst_34 : f32 to vector<2x4x128xf32>
    %121 = vector.broadcast %cst_35 : f32 to vector<2x4x128xf32>
    %122 = arith.select %119, %120, %121 : vector<2x4x128xi1>, vector<2x4x128xf32>
    %cst_36 = arith.constant dense<0.000000e+00> : vector<2x4xf32>
    %123 = vector.multi_reduction <add>, %122, %cst_36 [2] : vector<2x4x128xf32> to vector<2x4xf32>
    %124 = vector.shape_cast %123 : vector<2x4xf32> to vector<2x4x1xf32>
    %125 = vector.broadcast %24 : f32 to vector<2x4x1xf32>
    %126 = arith.cmpf oge, %124, %125 : vector<2x4x1xf32>
    %127 = arith.select %126, %117, %113 : vector<2x4x1xi1>, vector<2x4x1xf32>
    %128 = arith.select %126, %114, %117 : vector<2x4x1xi1>, vector<2x4x1xf32>
    %c7_i32 = arith.constant 7 : i32
    %129 = arith.addf %127, %128 : vector<2x4x1xf32>
    %cst_37 = arith.constant 5.000000e-01 : f32
    %130 = vector.broadcast %cst_37 : f32 to vector<2x4x1xf32>
    %131 = arith.mulf %130, %129 : vector<2x4x1xf32>
    %132 = vector.broadcast %131 : vector<2x4x1xf32> to vector<2x4x128xf32>
    %133 = arith.cmpf oge, %20, %132 : vector<2x4x128xf32>
    %cst_38 = arith.constant 1.000000e+00 : f32
    %cst_39 = arith.constant 0.000000e+00 : f32
    %134 = vector.broadcast %cst_38 : f32 to vector<2x4x128xf32>
    %135 = vector.broadcast %cst_39 : f32 to vector<2x4x128xf32>
    %136 = arith.select %133, %134, %135 : vector<2x4x128xi1>, vector<2x4x128xf32>
    %cst_40 = arith.constant dense<0.000000e+00> : vector<2x4xf32>
    %137 = vector.multi_reduction <add>, %136, %cst_40 [2] : vector<2x4x128xf32> to vector<2x4xf32>
    %138 = vector.shape_cast %137 : vector<2x4xf32> to vector<2x4x1xf32>
    %139 = vector.broadcast %24 : f32 to vector<2x4x1xf32>
    %140 = arith.cmpf oge, %138, %139 : vector<2x4x1xf32>
    %141 = arith.select %140, %131, %127 : vector<2x4x1xi1>, vector<2x4x1xf32>
    %142 = arith.select %140, %128, %131 : vector<2x4x1xi1>, vector<2x4x1xf32>
    %c8_i32 = arith.constant 8 : i32
    %143 = arith.addf %141, %142 : vector<2x4x1xf32>
    %cst_41 = arith.constant 5.000000e-01 : f32
    %144 = vector.broadcast %cst_41 : f32 to vector<2x4x1xf32>
    %145 = arith.mulf %144, %143 : vector<2x4x1xf32>
    %146 = vector.broadcast %145 : vector<2x4x1xf32> to vector<2x4x128xf32>
    %147 = arith.cmpf oge, %20, %146 : vector<2x4x128xf32>
    %cst_42 = arith.constant 1.000000e+00 : f32
    %cst_43 = arith.constant 0.000000e+00 : f32
    %148 = vector.broadcast %cst_42 : f32 to vector<2x4x128xf32>
    %149 = vector.broadcast %cst_43 : f32 to vector<2x4x128xf32>
    %150 = arith.select %147, %148, %149 : vector<2x4x128xi1>, vector<2x4x128xf32>
    %cst_44 = arith.constant dense<0.000000e+00> : vector<2x4xf32>
    %151 = vector.multi_reduction <add>, %150, %cst_44 [2] : vector<2x4x128xf32> to vector<2x4xf32>
    %152 = vector.shape_cast %151 : vector<2x4xf32> to vector<2x4x1xf32>
    %153 = vector.broadcast %24 : f32 to vector<2x4x1xf32>
    %154 = arith.cmpf oge, %152, %153 : vector<2x4x1xf32>
    %155 = arith.select %154, %145, %141 : vector<2x4x1xi1>, vector<2x4x1xf32>
    %156 = arith.select %154, %142, %145 : vector<2x4x1xi1>, vector<2x4x1xf32>
    %c9_i32 = arith.constant 9 : i32
    %157 = arith.addf %155, %156 : vector<2x4x1xf32>
    %cst_45 = arith.constant 5.000000e-01 : f32
    %158 = vector.broadcast %cst_45 : f32 to vector<2x4x1xf32>
    %159 = arith.mulf %158, %157 : vector<2x4x1xf32>
    %160 = vector.broadcast %159 : vector<2x4x1xf32> to vector<2x4x128xf32>
    %161 = arith.cmpf oge, %20, %160 : vector<2x4x128xf32>
    %cst_46 = arith.constant 1.000000e+00 : f32
    %cst_47 = arith.constant 0.000000e+00 : f32
    %162 = vector.broadcast %cst_46 : f32 to vector<2x4x128xf32>
    %163 = vector.broadcast %cst_47 : f32 to vector<2x4x128xf32>
    %164 = arith.select %161, %162, %163 : vector<2x4x128xi1>, vector<2x4x128xf32>
    %cst_48 = arith.constant dense<0.000000e+00> : vector<2x4xf32>
    %165 = vector.multi_reduction <add>, %164, %cst_48 [2] : vector<2x4x128xf32> to vector<2x4xf32>
    %166 = vector.shape_cast %165 : vector<2x4xf32> to vector<2x4x1xf32>
    %167 = vector.broadcast %24 : f32 to vector<2x4x1xf32>
    %168 = arith.cmpf oge, %166, %167 : vector<2x4x1xf32>
    %169 = arith.select %168, %159, %155 : vector<2x4x1xi1>, vector<2x4x1xf32>
    %170 = arith.select %168, %156, %159 : vector<2x4x1xi1>, vector<2x4x1xf32>
    %c10_i32 = arith.constant 10 : i32
    %171 = arith.addf %169, %170 : vector<2x4x1xf32>
    %cst_49 = arith.constant 5.000000e-01 : f32
    %172 = vector.broadcast %cst_49 : f32 to vector<2x4x1xf32>
    %173 = arith.mulf %172, %171 : vector<2x4x1xf32>
    %174 = vector.broadcast %173 : vector<2x4x1xf32> to vector<2x4x128xf32>
    %175 = arith.cmpf oge, %20, %174 : vector<2x4x128xf32>
    %cst_50 = arith.constant 1.000000e+00 : f32
    %cst_51 = arith.constant 0.000000e+00 : f32
    %176 = vector.broadcast %cst_50 : f32 to vector<2x4x128xf32>
    %177 = vector.broadcast %cst_51 : f32 to vector<2x4x128xf32>
    %178 = arith.select %175, %176, %177 : vector<2x4x128xi1>, vector<2x4x128xf32>
    %cst_52 = arith.constant dense<0.000000e+00> : vector<2x4xf32>
    %179 = vector.multi_reduction <add>, %178, %cst_52 [2] : vector<2x4x128xf32> to vector<2x4xf32>
    %180 = vector.shape_cast %179 : vector<2x4xf32> to vector<2x4x1xf32>
    %181 = vector.broadcast %24 : f32 to vector<2x4x1xf32>
    %182 = arith.cmpf oge, %180, %181 : vector<2x4x1xf32>
    %183 = arith.select %182, %173, %169 : vector<2x4x1xi1>, vector<2x4x1xf32>
    %184 = arith.select %182, %170, %173 : vector<2x4x1xi1>, vector<2x4x1xf32>
    %c11_i32 = arith.constant 11 : i32
    %185 = arith.addf %183, %184 : vector<2x4x1xf32>
    %cst_53 = arith.constant 5.000000e-01 : f32
    %186 = vector.broadcast %cst_53 : f32 to vector<2x4x1xf32>
    %187 = arith.mulf %186, %185 : vector<2x4x1xf32>
    %188 = vector.broadcast %187 : vector<2x4x1xf32> to vector<2x4x128xf32>
    %189 = arith.cmpf oge, %20, %188 : vector<2x4x128xf32>
    %cst_54 = arith.constant 1.000000e+00 : f32
    %cst_55 = arith.constant 0.000000e+00 : f32
    %190 = vector.broadcast %cst_54 : f32 to vector<2x4x128xf32>
    %191 = vector.broadcast %cst_55 : f32 to vector<2x4x128xf32>
    %192 = arith.select %189, %190, %191 : vector<2x4x128xi1>, vector<2x4x128xf32>
    %cst_56 = arith.constant dense<0.000000e+00> : vector<2x4xf32>
    %193 = vector.multi_reduction <add>, %192, %cst_56 [2] : vector<2x4x128xf32> to vector<2x4xf32>
    %194 = vector.shape_cast %193 : vector<2x4xf32> to vector<2x4x1xf32>
    %195 = vector.broadcast %24 : f32 to vector<2x4x1xf32>
    %196 = arith.cmpf oge, %194, %195 : vector<2x4x1xf32>
    %197 = arith.select %196, %187, %183 : vector<2x4x1xi1>, vector<2x4x1xf32>
    %198 = arith.select %196, %184, %187 : vector<2x4x1xi1>, vector<2x4x1xf32>
    %c12_i32 = arith.constant 12 : i32
    %199 = arith.addf %197, %198 : vector<2x4x1xf32>
    %cst_57 = arith.constant 5.000000e-01 : f32
    %200 = vector.broadcast %cst_57 : f32 to vector<2x4x1xf32>
    %201 = arith.mulf %200, %199 : vector<2x4x1xf32>
    %202 = vector.broadcast %201 : vector<2x4x1xf32> to vector<2x4x128xf32>
    %203 = arith.cmpf oge, %20, %202 : vector<2x4x128xf32>
    %cst_58 = arith.constant 1.000000e+00 : f32
    %cst_59 = arith.constant 0.000000e+00 : f32
    %204 = vector.broadcast %cst_58 : f32 to vector<2x4x128xf32>
    %205 = vector.broadcast %cst_59 : f32 to vector<2x4x128xf32>
    %206 = arith.select %203, %204, %205 : vector<2x4x128xi1>, vector<2x4x128xf32>
    %cst_60 = arith.constant dense<0.000000e+00> : vector<2x4xf32>
    %207 = vector.multi_reduction <add>, %206, %cst_60 [2] : vector<2x4x128xf32> to vector<2x4xf32>
    %208 = vector.shape_cast %207 : vector<2x4xf32> to vector<2x4x1xf32>
    %209 = vector.broadcast %24 : f32 to vector<2x4x1xf32>
    %210 = arith.cmpf oge, %208, %209 : vector<2x4x1xf32>
    %211 = arith.select %210, %201, %197 : vector<2x4x1xi1>, vector<2x4x1xf32>
    %212 = arith.select %210, %198, %201 : vector<2x4x1xi1>, vector<2x4x1xf32>
    %c13_i32 = arith.constant 13 : i32
    %213 = arith.addf %211, %212 : vector<2x4x1xf32>
    %cst_61 = arith.constant 5.000000e-01 : f32
    %214 = vector.broadcast %cst_61 : f32 to vector<2x4x1xf32>
    %215 = arith.mulf %214, %213 : vector<2x4x1xf32>
    %216 = vector.broadcast %215 : vector<2x4x1xf32> to vector<2x4x128xf32>
    %217 = arith.cmpf oge, %20, %216 : vector<2x4x128xf32>
    %cst_62 = arith.constant 1.000000e+00 : f32
    %cst_63 = arith.constant 0.000000e+00 : f32
    %218 = vector.broadcast %cst_62 : f32 to vector<2x4x128xf32>
    %219 = vector.broadcast %cst_63 : f32 to vector<2x4x128xf32>
    %220 = arith.select %217, %218, %219 : vector<2x4x128xi1>, vector<2x4x128xf32>
    %cst_64 = arith.constant dense<0.000000e+00> : vector<2x4xf32>
    %221 = vector.multi_reduction <add>, %220, %cst_64 [2] : vector<2x4x128xf32> to vector<2x4xf32>
    %222 = vector.shape_cast %221 : vector<2x4xf32> to vector<2x4x1xf32>
    %223 = vector.broadcast %24 : f32 to vector<2x4x1xf32>
    %224 = arith.cmpf oge, %222, %223 : vector<2x4x1xf32>
    %225 = arith.select %224, %215, %211 : vector<2x4x1xi1>, vector<2x4x1xf32>
    %226 = arith.select %224, %212, %215 : vector<2x4x1xi1>, vector<2x4x1xf32>
    %c14_i32 = arith.constant 14 : i32
    %227 = arith.addf %225, %226 : vector<2x4x1xf32>
    %cst_65 = arith.constant 5.000000e-01 : f32
    %228 = vector.broadcast %cst_65 : f32 to vector<2x4x1xf32>
    %229 = arith.mulf %228, %227 : vector<2x4x1xf32>
    %230 = vector.broadcast %229 : vector<2x4x1xf32> to vector<2x4x128xf32>
    %231 = arith.cmpf oge, %20, %230 : vector<2x4x128xf32>
    %cst_66 = arith.constant 1.000000e+00 : f32
    %cst_67 = arith.constant 0.000000e+00 : f32
    %232 = vector.broadcast %cst_66 : f32 to vector<2x4x128xf32>
    %233 = vector.broadcast %cst_67 : f32 to vector<2x4x128xf32>
    %234 = arith.select %231, %232, %233 : vector<2x4x128xi1>, vector<2x4x128xf32>
    %cst_68 = arith.constant dense<0.000000e+00> : vector<2x4xf32>
    %235 = vector.multi_reduction <add>, %234, %cst_68 [2] : vector<2x4x128xf32> to vector<2x4xf32>
    %236 = vector.shape_cast %235 : vector<2x4xf32> to vector<2x4x1xf32>
    %237 = vector.broadcast %24 : f32 to vector<2x4x1xf32>
    %238 = arith.cmpf oge, %236, %237 : vector<2x4x1xf32>
    %239 = arith.select %238, %229, %225 : vector<2x4x1xi1>, vector<2x4x1xf32>
    %240 = arith.select %238, %226, %229 : vector<2x4x1xi1>, vector<2x4x1xf32>
    %c15_i32 = arith.constant 15 : i32
    %241 = arith.addf %239, %240 : vector<2x4x1xf32>
    %cst_69 = arith.constant 5.000000e-01 : f32
    %242 = vector.broadcast %cst_69 : f32 to vector<2x4x1xf32>
    %243 = arith.mulf %242, %241 : vector<2x4x1xf32>
    %244 = vector.broadcast %243 : vector<2x4x1xf32> to vector<2x4x128xf32>
    %245 = arith.cmpf oge, %20, %244 : vector<2x4x128xf32>
    %cst_70 = arith.constant 1.000000e+00 : f32
    %cst_71 = arith.constant 0.000000e+00 : f32
    %246 = vector.broadcast %cst_70 : f32 to vector<2x4x128xf32>
    %247 = vector.broadcast %cst_71 : f32 to vector<2x4x128xf32>
    %248 = arith.select %245, %246, %247 : vector<2x4x128xi1>, vector<2x4x128xf32>
    %cst_72 = arith.constant dense<0.000000e+00> : vector<2x4xf32>
    %249 = vector.multi_reduction <add>, %248, %cst_72 [2] : vector<2x4x128xf32> to vector<2x4xf32>
    %250 = vector.shape_cast %249 : vector<2x4xf32> to vector<2x4x1xf32>
    %251 = vector.broadcast %24 : f32 to vector<2x4x1xf32>
    %252 = arith.cmpf oge, %250, %251 : vector<2x4x1xf32>
    %253 = arith.select %252, %243, %239 : vector<2x4x1xi1>, vector<2x4x1xf32>
    %254 = arith.select %252, %240, %243 : vector<2x4x1xi1>, vector<2x4x1xf32>
    %c16_i32 = arith.constant 16 : i32
    %255 = arith.addf %253, %254 : vector<2x4x1xf32>
    %cst_73 = arith.constant 5.000000e-01 : f32
    %256 = vector.broadcast %cst_73 : f32 to vector<2x4x1xf32>
    %257 = arith.mulf %256, %255 : vector<2x4x1xf32>
    %258 = vector.broadcast %257 : vector<2x4x1xf32> to vector<2x4x128xf32>
    %259 = arith.cmpf oge, %20, %258 : vector<2x4x128xf32>
    %cst_74 = arith.constant 1.000000e+00 : f32
    %cst_75 = arith.constant 0.000000e+00 : f32
    %260 = vector.broadcast %cst_74 : f32 to vector<2x4x128xf32>
    %261 = vector.broadcast %cst_75 : f32 to vector<2x4x128xf32>
    %262 = arith.select %259, %260, %261 : vector<2x4x128xi1>, vector<2x4x128xf32>
    %cst_76 = arith.constant dense<0.000000e+00> : vector<2x4xf32>
    %263 = vector.multi_reduction <add>, %262, %cst_76 [2] : vector<2x4x128xf32> to vector<2x4xf32>
    %264 = vector.shape_cast %263 : vector<2x4xf32> to vector<2x4x1xf32>
    %265 = vector.broadcast %24 : f32 to vector<2x4x1xf32>
    %266 = arith.cmpf oge, %264, %265 : vector<2x4x1xf32>
    %267 = arith.select %266, %257, %253 : vector<2x4x1xi1>, vector<2x4x1xf32>
    %268 = arith.select %266, %254, %257 : vector<2x4x1xi1>, vector<2x4x1xf32>
    %c17_i32 = arith.constant 17 : i32
    %269 = arith.addf %267, %268 : vector<2x4x1xf32>
    %cst_77 = arith.constant 5.000000e-01 : f32
    %270 = vector.broadcast %cst_77 : f32 to vector<2x4x1xf32>
    %271 = arith.mulf %270, %269 : vector<2x4x1xf32>
    %272 = vector.broadcast %271 : vector<2x4x1xf32> to vector<2x4x128xf32>
    %273 = arith.cmpf oge, %20, %272 : vector<2x4x128xf32>
    %cst_78 = arith.constant 1.000000e+00 : f32
    %cst_79 = arith.constant 0.000000e+00 : f32
    %274 = vector.broadcast %cst_78 : f32 to vector<2x4x128xf32>
    %275 = vector.broadcast %cst_79 : f32 to vector<2x4x128xf32>
    %276 = arith.select %273, %274, %275 : vector<2x4x128xi1>, vector<2x4x128xf32>
    %cst_80 = arith.constant dense<0.000000e+00> : vector<2x4xf32>
    %277 = vector.multi_reduction <add>, %276, %cst_80 [2] : vector<2x4x128xf32> to vector<2x4xf32>
    %278 = vector.shape_cast %277 : vector<2x4xf32> to vector<2x4x1xf32>
    %279 = vector.broadcast %24 : f32 to vector<2x4x1xf32>
    %280 = arith.cmpf oge, %278, %279 : vector<2x4x1xf32>
    %281 = arith.select %280, %271, %267 : vector<2x4x1xi1>, vector<2x4x1xf32>
    %282 = arith.select %280, %268, %271 : vector<2x4x1xi1>, vector<2x4x1xf32>
    %c18_i32 = arith.constant 18 : i32
    %283 = arith.addf %281, %282 : vector<2x4x1xf32>
    %cst_81 = arith.constant 5.000000e-01 : f32
    %284 = vector.broadcast %cst_81 : f32 to vector<2x4x1xf32>
    %285 = arith.mulf %284, %283 : vector<2x4x1xf32>
    %286 = vector.broadcast %285 : vector<2x4x1xf32> to vector<2x4x128xf32>
    %287 = arith.cmpf oge, %20, %286 : vector<2x4x128xf32>
    %cst_82 = arith.constant 1.000000e+00 : f32
    %cst_83 = arith.constant 0.000000e+00 : f32
    %288 = vector.broadcast %cst_82 : f32 to vector<2x4x128xf32>
    %289 = vector.broadcast %cst_83 : f32 to vector<2x4x128xf32>
    %290 = arith.select %287, %288, %289 : vector<2x4x128xi1>, vector<2x4x128xf32>
    %cst_84 = arith.constant dense<0.000000e+00> : vector<2x4xf32>
    %291 = vector.multi_reduction <add>, %290, %cst_84 [2] : vector<2x4x128xf32> to vector<2x4xf32>
    %292 = vector.shape_cast %291 : vector<2x4xf32> to vector<2x4x1xf32>
    %293 = vector.broadcast %24 : f32 to vector<2x4x1xf32>
    %294 = arith.cmpf oge, %292, %293 : vector<2x4x1xf32>
    %295 = arith.select %294, %285, %281 : vector<2x4x1xi1>, vector<2x4x1xf32>
    %296 = arith.select %294, %282, %285 : vector<2x4x1xi1>, vector<2x4x1xf32>
    %c19_i32 = arith.constant 19 : i32
    %297 = arith.addf %295, %296 : vector<2x4x1xf32>
    %cst_85 = arith.constant 5.000000e-01 : f32
    %298 = vector.broadcast %cst_85 : f32 to vector<2x4x1xf32>
    %299 = arith.mulf %298, %297 : vector<2x4x1xf32>
    %300 = vector.broadcast %299 : vector<2x4x1xf32> to vector<2x4x128xf32>
    %301 = arith.cmpf oge, %20, %300 : vector<2x4x128xf32>
    %cst_86 = arith.constant 1.000000e+00 : f32
    %cst_87 = arith.constant 0.000000e+00 : f32
    %302 = vector.broadcast %cst_86 : f32 to vector<2x4x128xf32>
    %303 = vector.broadcast %cst_87 : f32 to vector<2x4x128xf32>
    %304 = arith.select %301, %302, %303 : vector<2x4x128xi1>, vector<2x4x128xf32>
    %cst_88 = arith.constant dense<0.000000e+00> : vector<2x4xf32>
    %305 = vector.multi_reduction <add>, %304, %cst_88 [2] : vector<2x4x128xf32> to vector<2x4xf32>
    %306 = vector.shape_cast %305 : vector<2x4xf32> to vector<2x4x1xf32>
    %307 = vector.broadcast %24 : f32 to vector<2x4x1xf32>
    %308 = arith.cmpf oge, %306, %307 : vector<2x4x1xf32>
    %309 = arith.select %308, %299, %295 : vector<2x4x1xi1>, vector<2x4x1xf32>
    %310 = arith.select %308, %296, %299 : vector<2x4x1xi1>, vector<2x4x1xf32>
    %c20_i32 = arith.constant 20 : i32
    %311 = arith.addf %309, %310 : vector<2x4x1xf32>
    %cst_89 = arith.constant 5.000000e-01 : f32
    %312 = vector.broadcast %cst_89 : f32 to vector<2x4x1xf32>
    %313 = arith.mulf %312, %311 : vector<2x4x1xf32>
    %314 = vector.broadcast %313 : vector<2x4x1xf32> to vector<2x4x128xf32>
    %315 = arith.cmpf oge, %20, %314 : vector<2x4x128xf32>
    %cst_90 = arith.constant 1.000000e+00 : f32
    %cst_91 = arith.constant 0.000000e+00 : f32
    %316 = vector.broadcast %cst_90 : f32 to vector<2x4x128xf32>
    %317 = vector.broadcast %cst_91 : f32 to vector<2x4x128xf32>
    %318 = arith.select %315, %316, %317 : vector<2x4x128xi1>, vector<2x4x128xf32>
    %cst_92 = arith.constant dense<0.000000e+00> : vector<2x4xf32>
    %319 = vector.multi_reduction <add>, %318, %cst_92 [2] : vector<2x4x128xf32> to vector<2x4xf32>
    %320 = vector.shape_cast %319 : vector<2x4xf32> to vector<2x4x1xf32>
    %321 = vector.broadcast %24 : f32 to vector<2x4x1xf32>
    %322 = arith.cmpf oge, %320, %321 : vector<2x4x1xf32>
    %323 = arith.select %322, %313, %309 : vector<2x4x1xi1>, vector<2x4x1xf32>
    %324 = arith.select %322, %310, %313 : vector<2x4x1xi1>, vector<2x4x1xf32>
    %c21_i32 = arith.constant 21 : i32
    %325 = arith.addf %323, %324 : vector<2x4x1xf32>
    %cst_93 = arith.constant 5.000000e-01 : f32
    %326 = vector.broadcast %cst_93 : f32 to vector<2x4x1xf32>
    %327 = arith.mulf %326, %325 : vector<2x4x1xf32>
    %328 = vector.broadcast %327 : vector<2x4x1xf32> to vector<2x4x128xf32>
    %329 = arith.cmpf oge, %20, %328 : vector<2x4x128xf32>
    %cst_94 = arith.constant 1.000000e+00 : f32
    %cst_95 = arith.constant 0.000000e+00 : f32
    %330 = vector.broadcast %cst_94 : f32 to vector<2x4x128xf32>
    %331 = vector.broadcast %cst_95 : f32 to vector<2x4x128xf32>
    %332 = arith.select %329, %330, %331 : vector<2x4x128xi1>, vector<2x4x128xf32>
    %cst_96 = arith.constant dense<0.000000e+00> : vector<2x4xf32>
    %333 = vector.multi_reduction <add>, %332, %cst_96 [2] : vector<2x4x128xf32> to vector<2x4xf32>
    %334 = vector.shape_cast %333 : vector<2x4xf32> to vector<2x4x1xf32>
    %335 = vector.broadcast %24 : f32 to vector<2x4x1xf32>
    %336 = arith.cmpf oge, %334, %335 : vector<2x4x1xf32>
    %337 = arith.select %336, %327, %323 : vector<2x4x1xi1>, vector<2x4x1xf32>
    %338 = arith.select %336, %324, %327 : vector<2x4x1xi1>, vector<2x4x1xf32>
    %c22_i32 = arith.constant 22 : i32
    %339 = arith.addf %337, %338 : vector<2x4x1xf32>
    %cst_97 = arith.constant 5.000000e-01 : f32
    %340 = vector.broadcast %cst_97 : f32 to vector<2x4x1xf32>
    %341 = arith.mulf %340, %339 : vector<2x4x1xf32>
    %342 = vector.broadcast %341 : vector<2x4x1xf32> to vector<2x4x128xf32>
    %343 = arith.cmpf oge, %20, %342 : vector<2x4x128xf32>
    %cst_98 = arith.constant 1.000000e+00 : f32
    %cst_99 = arith.constant 0.000000e+00 : f32
    %344 = vector.broadcast %cst_98 : f32 to vector<2x4x128xf32>
    %345 = vector.broadcast %cst_99 : f32 to vector<2x4x128xf32>
    %346 = arith.select %343, %344, %345 : vector<2x4x128xi1>, vector<2x4x128xf32>
    %cst_100 = arith.constant dense<0.000000e+00> : vector<2x4xf32>
    %347 = vector.multi_reduction <add>, %346, %cst_100 [2] : vector<2x4x128xf32> to vector<2x4xf32>
    %348 = vector.shape_cast %347 : vector<2x4xf32> to vector<2x4x1xf32>
    %349 = vector.broadcast %24 : f32 to vector<2x4x1xf32>
    %350 = arith.cmpf oge, %348, %349 : vector<2x4x1xf32>
    %351 = arith.select %350, %341, %337 : vector<2x4x1xi1>, vector<2x4x1xf32>
    %352 = arith.select %350, %338, %341 : vector<2x4x1xi1>, vector<2x4x1xf32>
    %c23_i32 = arith.constant 23 : i32
    %353 = arith.addf %351, %352 : vector<2x4x1xf32>
    %cst_101 = arith.constant 5.000000e-01 : f32
    %354 = vector.broadcast %cst_101 : f32 to vector<2x4x1xf32>
    %355 = arith.mulf %354, %353 : vector<2x4x1xf32>
    %356 = vector.broadcast %355 : vector<2x4x1xf32> to vector<2x4x128xf32>
    %357 = arith.cmpf oge, %20, %356 : vector<2x4x128xf32>
    %cst_102 = arith.constant 1.000000e+00 : f32
    %cst_103 = arith.constant 0.000000e+00 : f32
    %358 = vector.broadcast %cst_102 : f32 to vector<2x4x128xf32>
    %359 = vector.broadcast %cst_103 : f32 to vector<2x4x128xf32>
    %360 = arith.select %357, %358, %359 : vector<2x4x128xi1>, vector<2x4x128xf32>
    %cst_104 = arith.constant dense<0.000000e+00> : vector<2x4xf32>
    %361 = vector.multi_reduction <add>, %360, %cst_104 [2] : vector<2x4x128xf32> to vector<2x4xf32>
    %362 = vector.shape_cast %361 : vector<2x4xf32> to vector<2x4x1xf32>
    %363 = vector.broadcast %24 : f32 to vector<2x4x1xf32>
    %364 = arith.cmpf oge, %362, %363 : vector<2x4x1xf32>
    %365 = arith.select %364, %355, %351 : vector<2x4x1xi1>, vector<2x4x1xf32>
    %366 = arith.select %364, %352, %355 : vector<2x4x1xi1>, vector<2x4x1xf32>
    %c24_i32 = arith.constant 24 : i32
    %367 = arith.addf %365, %366 : vector<2x4x1xf32>
    %cst_105 = arith.constant 5.000000e-01 : f32
    %368 = vector.broadcast %cst_105 : f32 to vector<2x4x1xf32>
    %369 = arith.mulf %368, %367 : vector<2x4x1xf32>
    %370 = vector.broadcast %369 : vector<2x4x1xf32> to vector<2x4x128xf32>
    %371 = arith.cmpf oge, %20, %370 : vector<2x4x128xf32>
    %cst_106 = arith.constant 1.000000e+00 : f32
    %cst_107 = arith.constant 0.000000e+00 : f32
    %372 = vector.broadcast %cst_106 : f32 to vector<2x4x128xf32>
    %373 = vector.broadcast %cst_107 : f32 to vector<2x4x128xf32>
    %374 = arith.select %371, %372, %373 : vector<2x4x128xi1>, vector<2x4x128xf32>
    %cst_108 = arith.constant dense<0.000000e+00> : vector<2x4xf32>
    %375 = vector.multi_reduction <add>, %374, %cst_108 [2] : vector<2x4x128xf32> to vector<2x4xf32>
    %376 = vector.shape_cast %375 : vector<2x4xf32> to vector<2x4x1xf32>
    %377 = vector.broadcast %24 : f32 to vector<2x4x1xf32>
    %378 = arith.cmpf oge, %376, %377 : vector<2x4x1xf32>
    %379 = arith.select %378, %369, %365 : vector<2x4x1xi1>, vector<2x4x1xf32>
    %380 = arith.select %378, %366, %369 : vector<2x4x1xi1>, vector<2x4x1xf32>
    %c25_i32 = arith.constant 25 : i32
    %381 = arith.addf %379, %380 : vector<2x4x1xf32>
    %cst_109 = arith.constant 5.000000e-01 : f32
    %382 = vector.broadcast %cst_109 : f32 to vector<2x4x1xf32>
    %383 = arith.mulf %382, %381 : vector<2x4x1xf32>
    %384 = vector.broadcast %383 : vector<2x4x1xf32> to vector<2x4x128xf32>
    %385 = arith.cmpf oge, %20, %384 : vector<2x4x128xf32>
    %cst_110 = arith.constant 1.000000e+00 : f32
    %cst_111 = arith.constant 0.000000e+00 : f32
    %386 = vector.broadcast %cst_110 : f32 to vector<2x4x128xf32>
    %387 = vector.broadcast %cst_111 : f32 to vector<2x4x128xf32>
    %388 = arith.select %385, %386, %387 : vector<2x4x128xi1>, vector<2x4x128xf32>
    %cst_112 = arith.constant dense<0.000000e+00> : vector<2x4xf32>
    %389 = vector.multi_reduction <add>, %388, %cst_112 [2] : vector<2x4x128xf32> to vector<2x4xf32>
    %390 = vector.shape_cast %389 : vector<2x4xf32> to vector<2x4x1xf32>
    %391 = vector.broadcast %24 : f32 to vector<2x4x1xf32>
    %392 = arith.cmpf oge, %390, %391 : vector<2x4x1xf32>
    %393 = arith.select %392, %383, %379 : vector<2x4x1xi1>, vector<2x4x1xf32>
    %394 = arith.select %392, %380, %383 : vector<2x4x1xi1>, vector<2x4x1xf32>
    %395 = vector.broadcast %393 : vector<2x4x1xf32> to vector<2x4x128xf32>
    %396 = arith.cmpf ogt, %20, %395 : vector<2x4x128xf32>
    %cst_113 = arith.constant 1.000000e+00 : f32
    %cst_114 = arith.constant 0.000000e+00 : f32
    %397 = vector.broadcast %cst_113 : f32 to vector<2x4x128xf32>
    %398 = vector.broadcast %cst_114 : f32 to vector<2x4x128xf32>
    %399 = arith.select %396, %397, %398 : vector<2x4x128xi1>, vector<2x4x128xf32>
    %cst_115 = arith.constant dense<0.000000e+00> : vector<2x4xf32>
    %400 = vector.multi_reduction <add>, %399, %cst_115 [2] : vector<2x4x128xf32> to vector<2x4xf32>
    %401 = vector.shape_cast %400 : vector<2x4xf32> to vector<2x4x1xf32>
    %402 = arith.mulf %20, %399 : vector<2x4x128xf32>
    %cst_116 = arith.constant dense<0.000000e+00> : vector<2x4xf32>
    %403 = vector.multi_reduction <add>, %402, %cst_116 [2] : vector<2x4x128xf32> to vector<2x4xf32>
    %404 = vector.shape_cast %403 : vector<2x4xf32> to vector<2x4x1xf32>
    %405 = vector.broadcast %24 : f32 to vector<2x4x1xf32>
    %406 = arith.subf %405, %401 : vector<2x4x1xf32>
    %407 = arith.mulf %406, %393 : vector<2x4x1xf32>
    %408 = arith.addf %404, %407 : vector<2x4x1xf32>
    %409 = vector.broadcast %24 : f32 to vector<2x4x1xf32>
    %410 = arith.divf %408, %409 : vector<2x4x1xf32>
    %c0_117 = arith.constant 0 : index
    %c0_118 = arith.constant 0 : index
    %411 = vector.load %arg6[%c0_117, %c0_118] : memref<2x4xf32, #tpu.memory_space<vmem>>, vector<2x4xf32>
    %412 = vector.shape_cast %410 : vector<2x4x1xf32> to vector<2x4xf32>
    %413 = arith.mulf %412, %411 : vector<2x4xf32>
    %414 = vector.shape_cast %28 : vector<2x4x1xf32> to vector<2x4xf32>
    %cst_119 = arith.constant 1.000000e+00 : f32
    %415 = vector.broadcast %cst_119 : f32 to vector<2x4xf32>
    %416 = arith.subf %415, %411 : vector<2x4xf32>
    %417 = arith.mulf %414, %416 : vector<2x4xf32>
    %418 = arith.addf %413, %417 : vector<2x4xf32>
    %c0_120 = arith.constant 0 : index
    %c0_121 = arith.constant 0 : index
    %c0_122 = arith.constant 0 : index
    %419 = vector.load %arg7[%c0_120, %c0_121, %c0_122] : memref<1x2x4xf32, #tpu.memory_space<vmem>>, vector<1x2x4xf32>
    %420 = vector.shape_cast %419 : vector<1x2x4xf32> to vector<2x4xf32>
    %421 = vector.shape_cast %418 : vector<2x4xf32> to vector<1x2x4xf32>
    tpu.vector_store %arg7[%c0_120, %c0_121, %c0_122], %421 {strides = array<i32>} : memref<1x2x4xf32, #tpu.memory_space<vmem>>, vector<1x2x4xf32>,
    return
  }
  func.func @transform_0(%arg0: i32, %arg1: memref<2xi32, #tpu.memory_space<smem>>, %arg2: memref<2xi32, #tpu.memory_space<smem>>, %arg3: memref<2xi32, #tpu.memory_space<smem>>) -> (i32, i32, i32) {
    %c0_i32 = arith.constant 0 : i32
    %c0_i32_0 = arith.constant 0 : i32
    %c0_i32_1 = arith.constant 0 : i32
    %c0_i32_2 = arith.constant 0 : i32
    return %c0_i32, %c0_i32_0, %c0_i32_1 : i32, i32, i32
  }
  func.func @transform_1(%arg0: i32, %arg1: memref<2xi32, #tpu.memory_space<smem>>, %arg2: memref<2xi32, #tpu.memory_space<smem>>, %arg3: memref<2xi32, #tpu.memory_space<smem>>) -> (i32, i32, i32) {
    %c0_i32 = arith.constant 0 : i32
    %c0_i32_0 = arith.constant 0 : i32
    %c0_i32_1 = arith.constant 0 : i32
    %c0_i32_2 = arith.constant 0 : i32
    return %c0_i32, %c0_i32_0, %c0_i32_1 : i32, i32, i32
  }
  func.func @transform_2(%arg0: i32, %arg1: memref<2xi32, #tpu.memory_space<smem>>, %arg2: memref<2xi32, #tpu.memory_space<smem>>, %arg3: memref<2xi32, #tpu.memory_space<smem>>) -> (i32, i32) {
    %c0_i32 = arith.constant 0 : i32
    %c0_i32_0 = arith.constant 0 : i32
    %c0_i32_1 = arith.constant 0 : i32
    return %c0_i32, %c0_i32_0 : i32, i32
  }
  func.func @transform_3(%arg0: i32, %arg1: memref<2xi32, #tpu.memory_space<smem>>, %arg2: memref<2xi32, #tpu.memory_space<smem>>, %arg3: memref<2xi32, #tpu.memory_space<smem>>) -> (i32, i32, i32) {
    %c0_i32 = arith.constant 0 : i32
    %c0_i32_0 = arith.constant 0 : i32
    %c0_i32_1 = arith.constant 0 : i32
    return %arg0, %c0_i32, %c0_i32_0 : i32, i32, i32
  }
}

</mosaic_0001>

<llo_original>
// kernel: total_loss.3
$region0: #{total_loss.3}
  #allocation0 [shape = 'u32[]', space=smem, size = 0x4, offset = 0x4, fixed_abs, tag = 'smem constant byte address 0x4 - core index']
  #allocation1 [shape = 'u32[144,128]{1,0:T(1,128)}', space=vmem, size = 0x12000, scoped, tag = 'internal scratch']
  #allocation2 [shape = 'f32[4,1]{1,0:T(4,128)}', space=vmem, size = 0x800, scoped, tag = 'scratch operand']
  %s0 = inlined_call_operand.vmem [shape: f32[2,5,128], index: 0, kind: input, shape index: {}]
  %s1 = inlined_call_operand.vmem [shape: f32[2,4,128], index: 1, kind: input, shape index: {}]
  %s2 = inlined_call_operand.vmem [shape: f32[2,1,128], index: 2, kind: input, shape index: {}]
  %s3 = inlined_call_operand.vmem [shape: f32[2,4,1], index: 3, kind: output, shape index: {}]
  %s4 = sld [smem:[#allocation0]]
  $region53: #{total_loss.3} parent=0
    _
  %s6 = ssub.s32 1, %s4
  %s7 = scalar_select 0, %s6, %s4
  loop: start=0, step=1, limit=4
  $region2: #{total_loss.3} parent=0 // loop_pre_header
    _
  $region3: #{total_loss.3} parent=0 // loop_header
    %s9 = sphi 0, %s13
    %p10 = scmp.ge.s32.totalorder %s9, 4
    %s16 = sphi 0, %s28
    %s17 = sphi 0, %s24
    %s18 = sphi 0, %s16
    %s19 = sphi 0, %s17
    %s20 = sphi 0, %s18
    %s21 = sphi 0, %s19
    %s33 = sphi 0, %s35
    %s36 = sphi 0, %s33
    %s37 = sphi 0, %s36
    %s53 = sphi 0, %s37
    %s61 = sphi 0, %s63
    %s64 = sphi 0, %s61
    %s65 = sphi 0, %s64
    %s81 = sphi 0, %s65
    %s89 = sphi 0, %s91
    %s92 = sphi 0, %s89
    %s93 = sphi 0, %s92
    %s109 = sphi 0, %s93
    %s115 = sphi 0, %s117
    %s118 = sphi 0, %s115
    %s119 = sphi 0, %s118
    %s135 = sphi 0, %s119
  $region4: #{total_loss.3} parent=0 // loop_header_branch
    %12 = sbr.rel (%p10) target = $region8
  $region5: #{total_loss.3} parent=0 // loop_body
    %s14 = ssub.s32 %s9, 1
    %s15 = ssub.s32 %s9, 2
    %s22 = sadd.s32 1, %s17
    %p23 = scmp.ge.s32.totalorder %s22, 1
    %s24 = scalar_select %p23, 0, %s22
    %s25 = sadd.s32 1, %s16
    %s26 = scalar_select %p23, %s25, %s16
    %p27 = scmp.ge.s32.totalorder %s26, 2
    %s28 = scalar_select %p27, 0, %s26
    %s29 = ssub.s32 %s16, %s28
    %s30 = ssub.s32 %s17, %s24
    %s31 = sor.u32 %s29, %s30
    %p32 = scmp.eq.s32.totalorder %s31, 0
    %s34 = sadd.s32 %s33, 1
    %s35 = scalar_select %p32, %s33, %s34
    %p38 = pneg %p32
    %p39 = scmp.eq.s32.totalorder %s9, 1
    %p40 = por %p38, %p39
    %p41 = scmp.ne.s32.totalorder %s33, %s36
    %p42 = scmp.eq.s32.totalorder %s9, 0
    %p43 = por %p41, %p42
    %p44 = scmp.ne.s32.totalorder %s33, %s36
    %p45 = scmp.eq.s32.totalorder %s14, 1
    %p46 = por %p44, %p45
    %p47 = scmp.ne.s32.totalorder %s36, %s37
    %p48 = scmp.eq.s32.totalorder %s14, 0
    %p49 = por %p47, %p48
    %p50 = scmp.ne.s32.totalorder %s36, %s37
    %p51 = scmp.eq.s32.totalorder %s15, 1
    %p52 = por %p50, %p51
    %p54 = scmp.ne.s32.totalorder %s37, %s53
    %p55 = scmp.eq.s32.totalorder %s15, 0
    %p56 = por %p54, %p55
    %s57 = ssub.s32 %s16, %s28
    %s58 = ssub.s32 %s17, %s24
    %s59 = sor.u32 %s57, %s58
    %p60 = scmp.eq.s32.totalorder %s59, 0
    %s62 = sadd.s32 %s61, 1
    %s63 = scalar_select %p60, %s61, %s62
    %p66 = pneg %p60
    %p67 = scmp.eq.s32.totalorder %s9, 1
    %p68 = por %p66, %p67
    %p69 = scmp.ne.s32.totalorder %s61, %s64
    %p70 = scmp.eq.s32.totalorder %s9, 0
    %p71 = por %p69, %p70
    %p72 = scmp.ne.s32.totalorder %s61, %s64
    %p73 = scmp.eq.s32.totalorder %s14, 1
    %p74 = por %p72, %p73
    %p75 = scmp.ne.s32.totalorder %s64, %s65
    %p76 = scmp.eq.s32.totalorder %s14, 0
    %p77 = por %p75, %p76
    %p78 = scmp.ne.s32.totalorder %s64, %s65
    %p79 = scmp.eq.s32.totalorder %s15, 1
    %p80 = por %p78, %p79
    %p82 = scmp.ne.s32.totalorder %s65, %s81
    %p83 = scmp.eq.s32.totalorder %s15, 0
    %p84 = por %p82, %p83
    %s85 = ssub.s32 %s16, %s28
    %s86 = ssub.s32 %s17, %s24
    %s87 = sor.u32 %s85, %s86
    %p88 = scmp.eq.s32.totalorder %s87, 0
    %s90 = sadd.s32 %s89, 1
    %s91 = scalar_select %p88, %s89, %s90
    %p94 = pneg %p88
    %p95 = scmp.eq.s32.totalorder %s9, 1
    %p96 = por %p94, %p95
    %p97 = scmp.ne.s32.totalorder %s89, %s92
    %p98 = scmp.eq.s32.totalorder %s9, 0
    %p99 = por %p97, %p98
    %p100 = scmp.ne.s32.totalorder %s89, %s92
    %p101 = scmp.eq.s32.totalorder %s14, 1
    %p102 = por %p100, %p101
    %p103 = scmp.ne.s32.totalorder %s92, %s93
    %p104 = scmp.eq.s32.totalorder %s14, 0
    %p105 = por %p103, %p104
    %p106 = scmp.ne.s32.totalorder %s92, %s93
    %p107 = scmp.eq.s32.totalorder %s15, 1
    %p108 = por %p106, %p107
    %p110 = scmp.ne.s32.totalorder %s93, %s109
    %p111 = scmp.eq.s32.totalorder %s15, 0
    %p112 = por %p110, %p111
    %s113 = ssub.s32 %s16, %s28
    %p114 = scmp.eq.s32.totalorder %s113, 0
    %s116 = sadd.s32 %s115, 1
    %s117 = scalar_select %p114, %s115, %s116
    %p120 = pneg %p114
    %p121 = scmp.eq.s32.totalorder %s9, 1
    %p122 = por %p120, %p121
    %p123 = scmp.ne.s32.totalorder %s115, %s118
    %p124 = scmp.eq.s32.totalorder %s9, 0
    %p125 = por %p123, %p124
    %p126 = scmp.ne.s32.totalorder %s115, %s118
    %p127 = scmp.eq.s32.totalorder %s14, 1
    %p128 = por %p126, %p127
    %p129 = scmp.ne.s32.totalorder %s118, %s119
    %p130 = scmp.eq.s32.totalorder %s14, 0
    %p131 = por %p129, %p130
    %p132 = scmp.ne.s32.totalorder %s118, %s119
    %p133 = scmp.eq.s32.totalorder %s15, 1
    %p134 = por %p132, %p133
    %p136 = scmp.ne.s32.totalorder %s119, %s135
    %p137 = scmp.eq.s32.totalorder %s15, 0
    %p138 = por %p136, %p137
    %p139 = scmp.le.s32.totalorder 1, %s9
    %p140 = scmp.lt.s32.totalorder %s9, 3
    %p141 = pnand %p139, %p140
    %p142 = pneg %p141
    // Predicated region
    $region9: #{total_loss.3} parent=5 // pred_check
      _
    $region10: #{total_loss.3} parent=5 // pred_check_branch
      %144 = sbr.rel (%p141) target = $region12
    $region11: #{total_loss.3} parent=5 // pred_region
      %s145 = ssub.s32 %s9, 1
    $region12: #{total_loss.3} parent=5 // pred_fallthru
      _
    %p146 = scmp.lt.s32.totalorder %s9, 2
    // Predicated region
    $region13: #{total_loss.3} parent=5 // pred_check
      %p147 = pneg %p146
    $region14: #{total_loss.3} parent=5 // pred_check_branch
      %149 = sbr.rel (%p147) target = $region16
    $region15: #{total_loss.3} parent=5 // pred_region
      // Predicated region
      $region17: #{total_loss.3} parent=15 // pred_check
        %p150 = pneg %p43
      $region18: #{total_loss.3} parent=15 // pred_check_branch
        %152 = sbr.rel (%p150) target = $region20
      $region19: #{total_loss.3} parent=15 // pred_region
        %p153 = scmp.lt.s32.totalorder %s16, 1
        %s154 = scalar_select %p153, %s16, 1
        %p155 = scmp.lt.s32.totalorder %s17, 0
        %s156 = scalar_select %p155, %s17, 0
        %s157 = sadd.s32 %s156, %s154
        %s158 = smul.addr %s157, 8
        %s159 = scalar_lea.vmem %s0, %s158
      $region20: #{total_loss.3} parent=15 // pred_fallthru
        _
      // Predicated region
      $region21: #{total_loss.3} parent=15 // pred_check
        %p160 = pneg %p71
      $region22: #{total_loss.3} parent=15 // pred_check_branch
        %162 = sbr.rel (%p160) target = $region24
      $region23: #{total_loss.3} parent=15 // pred_region
        %p163 = scmp.lt.s32.totalorder %s16, 1
        %s164 = scalar_select %p163, %s16, 1
        %p165 = scmp.lt.s32.totalorder %s17, 0
        %s166 = scalar_select %p165, %s17, 0
        %s167 = sadd.s32 %s166, %s164
        %s168 = smul.addr %s167, 4
        %s169 = scalar_lea.vmem %s1, %s168
      $region24: #{total_loss.3} parent=15 // pred_fallthru
        _
      // Predicated region
      $region25: #{total_loss.3} parent=15 // pred_check
        %p170 = pneg %p99
      $region26: #{total_loss.3} parent=15 // pred_check_branch
        %172 = sbr.rel (%p170) target = $region28
      $region27: #{total_loss.3} parent=15 // pred_region
        %p173 = scmp.lt.s32.totalorder %s16, 1
        %s174 = scalar_select %p173, %s16, 1
        %p175 = scmp.lt.s32.totalorder %s17, 0
        %s176 = scalar_select %p175, %s17, 0
        %s177 = sadd.s32 %s176, %s174
        %s178 = scalar_lea.vmem %s2, %s177
      $region28: #{total_loss.3} parent=15 // pred_fallthru
        _
    $region16: #{total_loss.3} parent=5 // pred_fallthru
      _
    %p179 = scmp.le.s32.totalorder 1, %s9
    %p180 = scmp.lt.s32.totalorder %s9, 3
    %p181 = pnand %p179, %p180
    %p182 = pneg %p181
    // Predicated region
    $region29: #{total_loss.3} parent=5 // pred_check
      _
    $region30: #{total_loss.3} parent=5 // pred_check_branch
      %184 = sbr.rel (%p181) target = $region32
    $region31: #{total_loss.3} parent=5 // pred_region
      %s185 = ssub.s32 %s9, 1
      %p186 = scmp.lt.s32.totalorder %s18, 1
      %s187 = scalar_select %p186, %s18, 1
      %p188 = scmp.lt.s32.totalorder %s19, 0
      %s189 = scalar_select %p188, %s19, 0
      %s190 = sadd.s32 %s189, %s187
      %s191 = smul.addr %s190, 8
      %s192 = scalar_lea.vmem %s0, %s191
      %p193 = pneg %p49
      %p194 = pneg %p46
      %p195 = scmp.lt.s32.totalorder %s18, 1
      %s196 = scalar_select %p195, %s18, 1
      %p197 = scmp.lt.s32.totalorder %s19, 0
      %s198 = scalar_select %p197, %s19, 0
      %s199 = sadd.s32 %s198, %s196
      %s200 = smul.addr %s199, 4
      %s201 = scalar_lea.vmem %s1, %s200
      %p202 = pneg %p77
      %p203 = pneg %p74
      %p204 = scmp.lt.s32.totalorder %s18, 1
      %s205 = scalar_select %p204, %s18, 1
      %p206 = scmp.lt.s32.totalorder %s19, 0
      %s207 = scalar_select %p206, %s19, 0
      %s208 = sadd.s32 %s207, %s205
      %s209 = scalar_lea.vmem %s2, %s208
      %p210 = pneg %p105
      %p211 = pneg %p102
      %p212 = pneg %p131
      %p213 = pneg %p128
      %p214 = scmp.lt.s32.totalorder %s18, 1
      %s215 = scalar_select %p214, %s18, 1
      %s216 = smul.addr %s215, 4
      %s217 = scalar_lea.vmem %s3, %s216
      %p218 = scmp.lt.s32.totalorder %s18, 1
      %s219 = scalar_select %p218, %s18, 1
      %p220 = scmp.lt.s32.totalorder %s19, 0
      %s221 = scalar_select %p220, %s19, 0
      %s222 = sadd.s32 %s221, %s219
      %s223 = smul.addr %s222, 8
      %s224 = scalar_lea.vmem %s0, %s223
      %p225 = scmp.lt.s32.totalorder %s18, 1
      %s226 = scalar_select %p225, %s18, 1
      %p227 = scmp.lt.s32.totalorder %s19, 0
      %s228 = scalar_select %p227, %s19, 0
      %s229 = sadd.s32 %s228, %s226
      %s230 = smul.addr %s229, 4
      %s231 = scalar_lea.vmem %s1, %s230
      %p232 = scmp.lt.s32.totalorder %s18, 1
      %s233 = scalar_select %p232, %s18, 1
      %p234 = scmp.lt.s32.totalorder %s19, 0
      %s235 = scalar_select %p234, %s19, 0
      %s236 = sadd.s32 %s235, %s233
      %s237 = scalar_lea.vmem %s2, %s236
      %p238 = scmp.lt.s32.totalorder %s18, 1
      %s239 = scalar_select %p238, %s18, 1
      %s240 = smul.addr %s239, 4
      %s241 = scalar_lea.vmem %s3, %s240
      %p242 = scmp.eq.s32.totalorder %s19, 0
      // Predicated region
      $region33: #{total_loss.3} parent=31 // pred_check
        %p243 = pneg %p242
      $region34: #{total_loss.3} parent=31 // pred_check_branch
        %245 = sbr.rel (%p243) target = $region36
      $region35: #{total_loss.3} parent=31 // pred_region
        %vm246 = vcmask 3072
        %247 = vst.msk [vmem:[#allocation2] sm:$0xf] %vm246, 0.0
      $region36: #{total_loss.3} parent=31 // pred_fallthru
        _
      %v248 = vld [vmem:[%s237] sm:$0x1]
      %v249 = vld [vmem:[%s224] sm:$0x1f]
      %v251 = vlaneseq
      %v252 = vshrl.u32 %v251, 7
      %v253 = vsub.s32 0, %v252
      %v254 = vrot.slane %v248, %v253
      %v256 = vmul.f32 %v249, %v254
      %v257 = vld [vmem:[%s231] sm:$0xf]
      %v258 = vmul.f32 %v257, %v254
      %vm259 = vcmask 1043456
      %v260 = vsel %vm259, %v258, -inf
      %v261 = vrot.slane %v260, 4
      %v262 = vmax.f32 %v260, %v261
      %v263 = vrot.slane %v262, 2
      %v264 = vmax.f32 %v262, %v263
      %v265 = vrot.slane %v264, 1
      %v266 = vmax.f32 %v264, %v265
      %vm267 = vcmp.lt.f32.partialorder %v266, 0.5
      %vm268 = vcmp.ge.f32.partialorder %v256, 0.95
      %vm269 = vmand %vm267, %vm268
      %v270 = vsel %vm269, 1.0, 0.0
      %v271 = vsel %vm259, %v258, %v270
      %vm272 = vcmp.gt.f32.partialorder %v271, 0.5
      %v273 = vsub.f32 1.0, %v256
      %v274 = vsel %vm272, %v256, %v273
      %v275 = vsub.f32 1.0, %v274
      %v276 = vmul.f32 %v275, %v275
      %v277 = vlog2.pop %v274
      %v278 = vmul.f32 %v277, 0.6931472
      %v279 = vmax.f32 %v278, -100.0
      %v280 = vsub.f32 0.0, %v279
      %v281 = vmul.f32 %v276, %v280
      %vm282 = vcmask 1044480
      %v283 = vsel %vm282, %v281, 0.0
      %v284 = vrot.slane %v283, 4
      %v285 = vadd.f32 %v283, %v284
      %v286 = vrot.slane %v285, 2
      %v287 = vadd.f32 %v285, %v286
      %v288 = vrot.slane %v287, 1
      %v289 = vadd.f32 %v287, %v288
      %v290 = vmul.f32 %v289, %v266
      %v291 = vmul.f32 %v289, %v270
      %v293 = vrot.slane %v291, 2
      %v296 = vrot.slane %v270, 1
      %vm298 = vcmask 1040384
      %v299 = vsel %vm298, %v290, %v266
      %vm300 = vcmask 1041408
      %v301 = vsel %vm300, %v299, %v293
      %vm302 = vcmask 1042432
      %v303 = vsel %vm302, %v301, %v296
      %v304 = vld [vmem:[#allocation2] sm:$0xf]
      %305 = vmatprep.subr.mxu0 0.0
      %306 = vmatpush1.msra.mxu0 1.0
      %307 = vmatprep.subr.mxu0 0.0
      %308 = vmatpush1.msra.mxu0 1.0
      %309 = vmatprep.subr.mxu0 0.0
      %310 = vmatpush1.msra.mxu0 1.0
      %311 = vmatprep.subr.mxu0 0.0
      %312 = vmatpush1.msra.mxu0 1.0
      %313 = vmatprep.subr.mxu0 0.0
      %314 = vmatpush1.msra.mxu0 1.0
      %315 = vmatprep.subr.mxu0 0.0
      %316 = vmatpush1.msra.mxu0 1.0
      %317 = vmatprep.subr.mxu0 0.0
      %318 = vmatpush1.msra.mxu0 1.0
      %319 = vmatprep.subr.mxu0 0.0
      %320 = vmatpush1.msra.mxu0 1.0
      %321 = vmatprep.subr.mxu0 0.0
      %322 = vmatpush1.msra.mxu0 1.0
      %323 = vmatprep.subr.mxu0 0.0
      %324 = vmatpush1.msra.mxu0 1.0
      %325 = vmatprep.subr.mxu0 0.0
      %326 = vmatpush1.msra.mxu0 1.0
      %327 = vmatprep.subr.mxu0 0.0
      %328 = vmatpush1.msra.mxu0 1.0
      %329 = vmatprep.subr.mxu0 0.0
      %330 = vmatpush1.msra.mxu0 1.0
      %331 = vmatprep.subr.mxu0 0.0
      %332 = vmatpush1.msra.mxu0 1.0
      %333 = vmatprep.subr.mxu0 0.0
      %334 = vmatpush1.msra.mxu0 1.0
      %335 = vmatprep.subr.mxu0 0.0
      %336 = vmatpush1.msra.mxu0 1.0
      %337 = vmatprep.subr.mxu0 0.0
      %338 = vmatpush2.msra.mxu0 0.0
      %339 = vmatprep.subr.mxu0 0.0
      %340 = vmatpush2.msra.mxu0 0.0
      %341 = vmatprep.subr.mxu0 0.0
      %342 = vmatpush2.msra.mxu0 0.0
      %343 = vmatprep.subr.mxu0 0.0
      %344 = vmatpush2.msra.mxu0 0.0
      %345 = vmatprep.subr.mxu0 0.0
      %346 = vmatpush2.msra.mxu0 0.0
      %347 = vmatprep.subr.mxu0 0.0
      %348 = vmatpush2.msra.mxu0 0.0
      %349 = vmatprep.subr.mxu0 0.0
      %350 = vmatpush2.msra.mxu0 0.0
      %351 = vmatprep.subr.mxu0 0.0
      %352 = vmatpush2.msra.mxu0 0.0
      %353 = vmatprep.subr.mxu0 0.0
      %354 = vmatpush2.msra.mxu0 0.0
      %355 = vmatprep.subr.mxu0 0.0
      %356 = vmatpush2.msra.mxu0 0.0
      %357 = vmatprep.subr.mxu0 0.0
      %358 = vmatpush2.msra.mxu0 0.0
      %359 = vmatprep.subr.mxu0 0.0
      %360 = vmatpush2.msra.mxu0 0.0
      %361 = vmatprep.subr.mxu0 0.0
      %362 = vmatpush2.msra.mxu0 0.0
      %363 = vmatprep.subr.mxu0 0.0
      %364 = vmatpush2.msra.mxu0 0.0
      %365 = vmatprep.subr.mxu0 0.0
      %366 = vmatpush2.msra.mxu0 0.0
      %367 = vmatprep.subr.mxu0 0.0
      %368 = vmatpush2.msra.mxu0 0.0
      %369 = vmatprep.mubr.f32.mxu0 0.0
      %v370 = vand.u32 %v303, 4294901760
      %v371 = vsub.f32 %v303, %v370
      %v372 = vand.u32 %v371, 4294901760
      %v373 = vsub.f32 %v371, %v372
      %v374 = vand.u32 %v373, 4294901760
      %375 = vmatmul.mubr.f32.gmra.mxu0 %v374
      %v376 = vpop.f32.mrf.mxu0
      %v377 = vadd.f32 0.0, %v376
      %v378 = vpop.f32.mrf.mxu0
      %379 = vdwg.mxu0
      %380 = vmatprep.subr.mxu0 0.0
      %381 = vmatpush1.msra.mxu0 0.0
      %382 = vmatprep.subr.mxu0 0.0
      %383 = vmatpush1.msra.mxu0 0.0
      %384 = vmatprep.subr.mxu0 0.0
      %385 = vmatpush1.msra.mxu0 0.0
      %386 = vmatprep.subr.mxu0 0.0
      %387 = vmatpush1.msra.mxu0 0.0
      %388 = vmatprep.subr.mxu0 0.0
      %389 = vmatpush1.msra.mxu0 0.0
      %390 = vmatprep.subr.mxu0 0.0
      %391 = vmatpush1.msra.mxu0 0.0
      %392 = vmatprep.subr.mxu0 0.0
      %393 = vmatpush1.msra.mxu0 0.0
      %394 = vmatprep.subr.mxu0 0.0
      %395 = vmatpush1.msra.mxu0 0.0
      %396 = vmatprep.subr.mxu0 0.0
      %397 = vmatpush1.msra.mxu0 0.0
      %398 = vmatprep.subr.mxu0 0.0
      %399 = vmatpush1.msra.mxu0 0.0
      %400 = vmatprep.subr.mxu0 0.0
      %401 = vmatpush1.msra.mxu0 0.0
      %402 = vmatprep.subr.mxu0 0.0
      %403 = vmatpush1.msra.mxu0 0.0
      %404 = vmatprep.subr.mxu0 0.0
      %405 = vmatpush1.msra.mxu0 0.0
      %406 = vmatprep.subr.mxu0 0.0
      %407 = vmatpush1.msra.mxu0 0.0
      %408 = vmatprep.subr.mxu0 0.0
      %409 = vmatpush1.msra.mxu0 0.0
      %410 = vmatprep.subr.mxu0 0.0
      %411 = vmatpush1.msra.mxu0 0.0
      %412 = vmatprep.subr.mxu0 0.0
      %413 = vmatpush2.msra.mxu0 0.0
      %414 = vmatprep.subr.mxu0 0.0
      %415 = vmatpush2.msra.mxu0 0.0
      %416 = vmatprep.subr.mxu0 0.0
      %417 = vmatpush2.msra.mxu0 0.0
      %418 = vmatprep.subr.mxu0 0.0
      %419 = vmatpush2.msra.mxu0 0.0
      %420 = vmatprep.subr.mxu0 0.0
      %421 = vmatpush2.msra.mxu0 0.0
      %422 = vmatprep.subr.mxu0 0.0
      %423 = vmatpush2.msra.mxu0 0.0
      %424 = vmatprep.subr.mxu0 0.0
      %425 = vmatpush2.msra.mxu0 0.0
      %426 = vmatprep.subr.mxu0 0.0
      %427 = vmatpush2.msra.mxu0 0.0
      %428 = vmatprep.subr.mxu0 0.0
      %429 = vmatpush2.msra.mxu0 0.0
      %430 = vmatprep.subr.mxu0 0.0
      %431 = vmatpush2.msra.mxu0 0.0
      %432 = vmatprep.subr.mxu0 0.0
      %433 = vmatpush2.msra.mxu0 0.0
      %434 = vmatprep.subr.mxu0 0.0
      %435 = vmatpush2.msra.mxu0 0.0
      %436 = vmatprep.subr.mxu0 0.0
      %437 = vmatpush2.msra.mxu0 0.0
      %438 = vmatprep.subr.mxu0 0.0
      %439 = vmatpush2.msra.mxu0 0.0
      %440 = vmatprep.subr.mxu0 0.0
      %441 = vmatpush2.msra.mxu0 0.0
      %442 = vmatprep.subr.mxu0 0.0
      %443 = vmatpush2.msra.mxu0 0.0
      %444 = vmatprep.mubr.f32.mxu0 0.0
      %v445 = vand.u32 %v303, 4294901760
      %446 = vmatmul.mubr.f32.gmra.mxu0 %v445
      %v447 = vpop.f32.mrf.mxu0
      %v448 = vadd.f32 %v377, %v447
      %v449 = vpop.f32.mrf.mxu0
      %450 = vdwg.mxu0
      %451 = vmatprep.subr.mxu0 0.0
      %452 = vmatpush1.msra.mxu0 0.0
      %453 = vmatprep.subr.mxu0 0.0
      %454 = vmatpush1.msra.mxu0 0.0
      %455 = vmatprep.subr.mxu0 0.0
      %456 = vmatpush1.msra.mxu0 0.0
      %457 = vmatprep.subr.mxu0 0.0
      %458 = vmatpush1.msra.mxu0 0.0
      %459 = vmatprep.subr.mxu0 0.0
      %460 = vmatpush1.msra.mxu0 0.0
      %461 = vmatprep.subr.mxu0 0.0
      %462 = vmatpush1.msra.mxu0 0.0
      %463 = vmatprep.subr.mxu0 0.0
      %464 = vmatpush1.msra.mxu0 0.0
      %465 = vmatprep.subr.mxu0 0.0
      %466 = vmatpush1.msra.mxu0 0.0
      %467 = vmatprep.subr.mxu0 0.0
      %468 = vmatpush1.msra.mxu0 0.0
      %469 = vmatprep.subr.mxu0 0.0
      %470 = vmatpush1.msra.mxu0 0.0
      %471 = vmatprep.subr.mxu0 0.0
      %472 = vmatpush1.msra.mxu0 0.0
      %473 = vmatprep.subr.mxu0 0.0
      %474 = vmatpush1.msra.mxu0 0.0
      %475 = vmatprep.subr.mxu0 0.0
      %476 = vmatpush1.msra.mxu0 0.0
      %477 = vmatprep.subr.mxu0 0.0
      %478 = vmatpush1.msra.mxu0 0.0
      %479 = vmatprep.subr.mxu0 0.0
      %480 = vmatpush1.msra.mxu0 0.0
      %481 = vmatprep.subr.mxu0 0.0
      %482 = vmatpush1.msra.mxu0 0.0
      %483 = vmatprep.subr.mxu0 0.0
      %484 = vmatpush2.msra.mxu0 0.0
      %485 = vmatprep.subr.mxu0 0.0
      %486 = vmatpush2.msra.mxu0 0.0
      %487 = vmatprep.subr.mxu0 0.0
      %488 = vmatpush2.msra.mxu0 0.0
      %489 = vmatprep.subr.mxu0 0.0
      %490 = vmatpush2.msra.mxu0 0.0
      %491 = vmatprep.subr.mxu0 0.0
      %492 = vmatpush2.msra.mxu0 0.0
      %493 = vmatprep.subr.mxu0 0.0
      %494 = vmatpush2.msra.mxu0 0.0
      %495 = vmatprep.subr.mxu0 0.0
      %496 = vmatpush2.msra.mxu0 0.0
      %497 = vmatprep.subr.mxu0 0.0
      %498 = vmatpush2.msra.mxu0 0.0
      %499 = vmatprep.subr.mxu0 0.0
      %500 = vmatpush2.msra.mxu0 0.0
      %501 = vmatprep.subr.mxu0 0.0
      %502 = vmatpush2.msra.mxu0 0.0
      %503 = vmatprep.subr.mxu0 0.0
      %504 = vmatpush2.msra.mxu0 0.0
      %505 = vmatprep.subr.mxu0 0.0
      %506 = vmatpush2.msra.mxu0 0.0
      %507 = vmatprep.subr.mxu0 0.0
      %508 = vmatpush2.msra.mxu0 0.0
      %509 = vmatprep.subr.mxu0 0.0
      %510 = vmatpush2.msra.mxu0 0.0
      %511 = vmatprep.subr.mxu0 0.0
      %512 = vmatpush2.msra.mxu0 0.0
      %513 = vmatprep.subr.mxu0 0.0
      %514 = vmatpush2.msra.mxu0 0.0
      %515 = vmatprep.mubr.f32.mxu0 0.0
      %v516 = vand.u32 %v303, 4294901760
      %v517 = vsub.f32 %v303, %v516
      %518 = vmatmul.mubr.f32.gmra.mxu0 %v517
      %v519 = vpop.f32.mrf.mxu0
      %v520 = vadd.f32 %v448, %v519
      %v521 = vpop.f32.mrf.mxu0
      %522 = vdwg.mxu0
      %523 = vmatprep.subr.mxu0 0.0
      %524 = vmatpush1.msra.mxu0 1.0
      %525 = vmatprep.subr.mxu0 0.0
      %526 = vmatpush1.msra.mxu0 1.0
      %527 = vmatprep.subr.mxu0 0.0
      %528 = vmatpush1.msra.mxu0 1.0
      %529 = vmatprep.subr.mxu0 0.0
      %530 = vmatpush1.msra.mxu0 1.0
      %531 = vmatprep.subr.mxu0 0.0
      %532 = vmatpush1.msra.mxu0 1.0
      %533 = vmatprep.subr.mxu0 0.0
      %534 = vmatpush1.msra.mxu0 1.0
      %535 = vmatprep.subr.mxu0 0.0
      %536 = vmatpush1.msra.mxu0 1.0
      %537 = vmatprep.subr.mxu0 0.0
      %538 = vmatpush1.msra.mxu0 1.0
      %539 = vmatprep.subr.mxu0 0.0
      %540 = vmatpush1.msra.mxu0 1.0
      %541 = vmatprep.subr.mxu0 0.0
      %542 = vmatpush1.msra.mxu0 1.0
      %543 = vmatprep.subr.mxu0 0.0
      %544 = vmatpush1.msra.mxu0 1.0
      %545 = vmatprep.subr.mxu0 0.0
      %546 = vmatpush1.msra.mxu0 1.0
      %547 = vmatprep.subr.mxu0 0.0
      %548 = vmatpush1.msra.mxu0 1.0
      %549 = vmatprep.subr.mxu0 0.0
      %550 = vmatpush1.msra.mxu0 1.0
      %551 = vmatprep.subr.mxu0 0.0
      %552 = vmatpush1.msra.mxu0 1.0
      %553 = vmatprep.subr.mxu0 0.0
      %554 = vmatpush1.msra.mxu0 1.0
      %555 = vmatprep.subr.mxu0 0.0
      %556 = vmatpush2.msra.mxu0 0.0
      %557 = vmatprep.subr.mxu0 0.0
      %558 = vmatpush2.msra.mxu0 0.0
      %559 = vmatprep.subr.mxu0 0.0
      %560 = vmatpush2.msra.mxu0 0.0
      %561 = vmatprep.subr.mxu0 0.0
      %562 = vmatpush2.msra.mxu0 0.0
      %563 = vmatprep.subr.mxu0 0.0
      %564 = vmatpush2.msra.mxu0 0.0
      %565 = vmatprep.subr.mxu0 0.0
      %566 = vmatpush2.msra.mxu0 0.0
      %567 = vmatprep.subr.mxu0 0.0
      %568 = vmatpush2.msra.mxu0 0.0
      %569 = vmatprep.subr.mxu0 0.0
      %570 = vmatpush2.msra.mxu0 0.0
      %571 = vmatprep.subr.mxu0 0.0
      %572 = vmatpush2.msra.mxu0 0.0
      %573 = vmatprep.subr.mxu0 0.0
      %574 = vmatpush2.msra.mxu0 0.0
      %575 = vmatprep.subr.mxu0 0.0
      %576 = vmatpush2.msra.mxu0 0.0
      %577 = vmatprep.subr.mxu0 0.0
      %578 = vmatpush2.msra.mxu0 0.0
      %579 = vmatprep.subr.mxu0 0.0
      %580 = vmatpush2.msra.mxu0 0.0
      %581 = vmatprep.subr.mxu0 0.0
      %582 = vmatpush2.msra.mxu0 0.0
      %583 = vmatprep.subr.mxu0 0.0
      %584 = vmatpush2.msra.mxu0 0.0
      %585 = vmatprep.subr.mxu0 0.0
      %586 = vmatpush2.msra.mxu0 0.0
      %587 = vmatprep.mubr.f32.mxu0 0.0
      %v588 = vand.u32 %v303, 4294901760
      %v589 = vsub.f32 %v303, %v588
      %v590 = vand.u32 %v589, 4294901760
      %591 = vmatmul.mubr.f32.gmra.mxu0 %v590
      %v592 = vpop.f32.mrf.mxu0
      %v593 = vadd.f32 %v520, %v592
      %v594 = vpop.f32.mrf.mxu0
      %595 = vdwg.mxu0
      %596 = vmatprep.subr.mxu0 0.0
      %597 = vmatpush1.msra.mxu0 0.0
      %598 = vmatprep.subr.mxu0 0.0
      %599 = vmatpush1.msra.mxu0 0.0
      %600 = vmatprep.subr.mxu0 0.0
      %601 = vmatpush1.msra.mxu0 0.0
      %602 = vmatprep.subr.mxu0 0.0
      %603 = vmatpush1.msra.mxu0 0.0
      %604 = vmatprep.subr.mxu0 0.0
      %605 = vmatpush1.msra.mxu0 0.0
      %606 = vmatprep.subr.mxu0 0.0
      %607 = vmatpush1.msra.mxu0 0.0
      %608 = vmatprep.subr.mxu0 0.0
      %609 = vmatpush1.msra.mxu0 0.0
      %610 = vmatprep.subr.mxu0 0.0
      %611 = vmatpush1.msra.mxu0 0.0
      %612 = vmatprep.subr.mxu0 0.0
      %613 = vmatpush1.msra.mxu0 0.0
      %614 = vmatprep.subr.mxu0 0.0
      %615 = vmatpush1.msra.mxu0 0.0
      %616 = vmatprep.subr.mxu0 0.0
      %617 = vmatpush1.msra.mxu0 0.0
      %618 = vmatprep.subr.mxu0 0.0
      %619 = vmatpush1.msra.mxu0 0.0
      %620 = vmatprep.subr.mxu0 0.0
      %621 = vmatpush1.msra.mxu0 0.0
      %622 = vmatprep.subr.mxu0 0.0
      %623 = vmatpush1.msra.mxu0 0.0
      %624 = vmatprep.subr.mxu0 0.0
      %625 = vmatpush1.msra.mxu0 0.0
      %626 = vmatprep.subr.mxu0 0.0
      %627 = vmatpush1.msra.mxu0 0.0
      %628 = vmatprep.subr.mxu0 0.0
      %629 = vmatpush2.msra.mxu0 0.0
      %630 = vmatprep.subr.mxu0 0.0
      %631 = vmatpush2.msra.mxu0 0.0
      %632 = vmatprep.subr.mxu0 0.0
      %633 = vmatpush2.msra.mxu0 0.0
      %634 = vmatprep.subr.mxu0 0.0
      %635 = vmatpush2.msra.mxu0 0.0
      %636 = vmatprep.subr.mxu0 0.0
      %637 = vmatpush2.msra.mxu0 0.0
      %638 = vmatprep.subr.mxu0 0.0
      %639 = vmatpush2.msra.mxu0 0.0
      %640 = vmatprep.subr.mxu0 0.0
      %641 = vmatpush2.msra.mxu0 0.0
      %642 = vmatprep.subr.mxu0 0.0
      %643 = vmatpush2.msra.mxu0 0.0
      %644 = vmatprep.subr.mxu0 0.0
      %645 = vmatpush2.msra.mxu0 0.0
      %646 = vmatprep.subr.mxu0 0.0
      %647 = vmatpush2.msra.mxu0 0.0
      %648 = vmatprep.subr.mxu0 0.0
      %649 = vmatpush2.msra.mxu0 0.0
      %650 = vmatprep.subr.mxu0 0.0
      %651 = vmatpush2.msra.mxu0 0.0
      %652 = vmatprep.subr.mxu0 0.0
      %653 = vmatpush2.msra.mxu0 0.0
      %654 = vmatprep.subr.mxu0 0.0
      %655 = vmatpush2.msra.mxu0 0.0
      %656 = vmatprep.subr.mxu0 0.0
      %657 = vmatpush2.msra.mxu0 0.0
      %658 = vmatprep.subr.mxu0 0.0
      %659 = vmatpush2.msra.mxu0 0.0
      %660 = vmatprep.mubr.f32.mxu0 0.0
      %v661 = vand.u32 %v303, 4294901760
      %662 = vmatmul.mubr.f32.gmra.mxu0 %v661
      %v663 = vpop.f32.mrf.mxu0
      %v664 = vadd.f32 %v593, %v663
      %v665 = vpop.f32.mrf.mxu0
      %666 = vdwg.mxu0
      %667 = vmatprep.subr.mxu0 0.0
      %668 = vmatpush1.msra.mxu0 1.0
      %669 = vmatprep.subr.mxu0 0.0
      %670 = vmatpush1.msra.mxu0 1.0
      %671 = vmatprep.subr.mxu0 0.0
      %672 = vmatpush1.msra.mxu0 1.0
      %673 = vmatprep.subr.mxu0 0.0
      %674 = vmatpush1.msra.mxu0 1.0
      %675 = vmatprep.subr.mxu0 0.0
      %676 = vmatpush1.msra.mxu0 1.0
      %677 = vmatprep.subr.mxu0 0.0
      %678 = vmatpush1.msra.mxu0 1.0
      %679 = vmatprep.subr.mxu0 0.0
      %680 = vmatpush1.msra.mxu0 1.0
      %681 = vmatprep.subr.mxu0 0.0
      %682 = vmatpush1.msra.mxu0 1.0
      %683 = vmatprep.subr.mxu0 0.0
      %684 = vmatpush1.msra.mxu0 1.0
      %685 = vmatprep.subr.mxu0 0.0
      %686 = vmatpush1.msra.mxu0 1.0
      %687 = vmatprep.subr.mxu0 0.0
      %688 = vmatpush1.msra.mxu0 1.0
      %689 = vmatprep.subr.mxu0 0.0
      %690 = vmatpush1.msra.mxu0 1.0
      %691 = vmatprep.subr.mxu0 0.0
      %692 = vmatpush1.msra.mxu0 1.0
      %693 = vmatprep.subr.mxu0 0.0
      %694 = vmatpush1.msra.mxu0 1.0
      %695 = vmatprep.subr.mxu0 0.0
      %696 = vmatpush1.msra.mxu0 1.0
      %697 = vmatprep.subr.mxu0 0.0
      %698 = vmatpush1.msra.mxu0 1.0
      %699 = vmatprep.subr.mxu0 0.0
      %700 = vmatpush2.msra.mxu0 0.0
      %701 = vmatprep.subr.mxu0 0.0
      %702 = vmatpush2.msra.mxu0 0.0
      %703 = vmatprep.subr.mxu0 0.0
      %704 = vmatpush2.msra.mxu0 0.0
      %705 = vmatprep.subr.mxu0 0.0
      %706 = vmatpush2.msra.mxu0 0.0
      %707 = vmatprep.subr.mxu0 0.0
      %708 = vmatpush2.msra.mxu0 0.0
      %709 = vmatprep.subr.mxu0 0.0
      %710 = vmatpush2.msra.mxu0 0.0
      %711 = vmatprep.subr.mxu0 0.0
      %712 = vmatpush2.msra.mxu0 0.0
      %713 = vmatprep.subr.mxu0 0.0
      %714 = vmatpush2.msra.mxu0 0.0
      %715 = vmatprep.subr.mxu0 0.0
      %716 = vmatpush2.msra.mxu0 0.0
      %717 = vmatprep.subr.mxu0 0.0
      %718 = vmatpush2.msra.mxu0 0.0
      %719 = vmatprep.subr.mxu0 0.0
      %720 = vmatpush2.msra.mxu0 0.0
      %721 = vmatprep.subr.mxu0 0.0
      %722 = vmatpush2.msra.mxu0 0.0
      %723 = vmatprep.subr.mxu0 0.0
      %724 = vmatpush2.msra.mxu0 0.0
      %725 = vmatprep.subr.mxu0 0.0
      %726 = vmatpush2.msra.mxu0 0.0
      %727 = vmatprep.subr.mxu0 0.0
      %728 = vmatpush2.msra.mxu0 0.0
      %729 = vmatprep.subr.mxu0 0.0
      %730 = vmatpush2.msra.mxu0 0.0
      %731 = vmatprep.mubr.f32.mxu0 0.0
      %v732 = vand.u32 %v303, 4294901760
      %733 = vmatmul.mubr.f32.gmra.mxu0 %v732
      %v734 = vpop.f32.mrf.mxu0
      %v735 = vadd.f32 %v664, %v734
      %v736 = vpop.f32.mrf.mxu0
      %737 = vdwg.mxu0
      %v738 = vadd.f32 %v304, %v735
      %vm739 = vcmask 3072
      %740 = vst.msk [vmem:[#allocation2] sm:$0xf] %vm739, %v738
      // Predicated region
      $region37: #{total_loss.3} parent=31 // pred_check
        %p741 = pneg %p242
      $region38: #{total_loss.3} parent=31 // pred_check_branch
        %743 = sbr.rel (%p741) target = $region40
      $region39: #{total_loss.3} parent=31 // pred_region
        %v744 = vld [vmem:[#allocation2] sm:$0xf]
        %745 = vst.msk [vmem:[%s241] sm:$0xf] %vm739, %v744
      $region40: #{total_loss.3} parent=31 // pred_fallthru
        _
      %p746 = scmp.lt.s32.totalorder %s18, 1
      %s747 = scalar_select %p746, %s18, 1
      %s748 = smul.addr %s747, 4
      %s749 = scalar_lea.vmem %s3, %s748
      // Predicated region
      $region41: #{total_loss.3} parent=31 // pred_check
        %p750 = pneg %p128
      $region42: #{total_loss.3} parent=31 // pred_check_branch
        %752 = sbr.rel (%p750) target = $region44
      $region43: #{total_loss.3} parent=31 // pred_region
        _
      $region44: #{total_loss.3} parent=31 // pred_fallthru
        _
    $region32: #{total_loss.3} parent=5 // pred_fallthru
      _
    %p753 = scmp.le.s32.totalorder 2, %s9
    // Predicated region
    $region45: #{total_loss.3} parent=5 // pred_check
      %p754 = pneg %p753
    $region46: #{total_loss.3} parent=5 // pred_check_branch
      %756 = sbr.rel (%p754) target = $region48
    $region47: #{total_loss.3} parent=5 // pred_region
      %s757 = ssub.s32 %s9, 2
      // Predicated region
      $region49: #{total_loss.3} parent=47 // pred_check
        %p758 = pneg %p134
      $region50: #{total_loss.3} parent=47 // pred_check_branch
        %760 = sbr.rel (%p758) target = $region52
      $region51: #{total_loss.3} parent=47 // pred_region
        %p761 = scmp.lt.s32.totalorder %s20, 1
        %s762 = scalar_select %p761, %s20, 1
        %s763 = smul.addr %s762, 4
        %s764 = scalar_lea.vmem %s3, %s763
      $region52: #{total_loss.3} parent=47 // pred_fallthru
        _
    $region48: #{total_loss.3} parent=5 // pred_fallthru
      _
  $region6: #{total_loss.3} parent=0 // loop_footer
    %s13 = sadd.s32 1, %s9
  $region7: #{total_loss.3} parent=0 // loop_footer_branch
    %8 = sbr.rel target = $region3
  $region8: #{total_loss.3} parent=0 // loop_exit
    _

// kernel: total_loss.2
$region0: #{total_loss.2}
  #allocation0 [shape = 'u32[]', space=smem, size = 0x4, offset = 0x4, fixed_abs, tag = 'smem constant byte address 0x4 - core index']
  #allocation1 [shape = 'u32[144,128]{1,0:T(1,128)}', space=vmem, size = 0x12000, scoped, tag = 'internal scratch']
  #allocation2 [shape = 's32[1]{0}', space=sflag, size = 0x4, scoped, tag = 'scoped memory for total_loss.2']
  #allocation3 [shape = 'u8[512]{0}', space=smem, size = 0x200, scoped, tag = 'prefetched SMEM operand 0']
  #allocation4 [shape = 'u8[512]{0}', space=smem, size = 0x200, scoped, tag = 'prefetched SMEM operand 1']
  #allocation5 [shape = 'u8[512]{0}', space=smem, size = 0x200, scoped, tag = 'prefetched SMEM operand 2']
  %s0 = inlined_call_operand.vmem [shape: s32[2], index: 0, kind: input, shape index: {}]
  %s1 = inlined_call_operand.vmem [shape: s32[2], index: 1, kind: input, shape index: {}]
  %s2 = inlined_call_operand.vmem [shape: s32[2], index: 2, kind: input, shape index: {}]
  %s3 = inlined_call_operand.vmem [shape: f32[2,4,128], index: 3, kind: input, shape index: {}]
  %s4 = inlined_call_operand.vmem [shape: f32[2,1,128], index: 4, kind: input, shape index: {}]
  %s5 = inlined_call_operand.vmem [shape: f32[2,4], index: 5, kind: input, shape index: {}]
  %s6 = inlined_call_operand.vmem [shape: f32[2,2,4], index: 6, kind: output, shape index: {}]
  %s7 = sld [smem:[#allocation0]]
  $region45: #{total_loss.2} parent=0
    _
  %s9 = ssub.s32 1, %s7
  %s10 = scalar_select 0, %s9, %s7
  %s11 = sshll.u32 %s0, 4
  %s12 = int_to_ptr.vmem [resolvable:$true] %s11
  %14 = dma.vmem_to_smem %s12, 16, [#allocation3], [#allocation2]
  %s15 = sshll.u32 %s1, 4
  %s16 = int_to_ptr.vmem [resolvable:$true] %s15
  %18 = dma.vmem_to_smem %s16, 16, [#allocation4], [#allocation2]
  %s19 = sshll.u32 %s2, 4
  %s20 = int_to_ptr.vmem [resolvable:$true] %s19
  %22 = dma.vmem_to_smem %s20, 16, [#allocation5], [#allocation2]
  %23 = dma.done [#allocation2], 48
  %24 = sfence
  loop: start=0, step=1, limit=4
  $region2: #{total_loss.2} parent=0 // loop_pre_header
    _
  $region3: #{total_loss.2} parent=0 // loop_header
    %s26 = sphi 0, %s30
    %p27 = scmp.ge.s32.totalorder %s26, 4
    %s34 = sphi 0, %s34
    %s36 = sphi 0, %s34
    %s37 = sphi 0, %s36
    %s51 = sphi 0, %s37
    %s55 = sphi 0, %s55
    %s57 = sphi 0, %s55
    %s58 = sphi 0, %s57
    %s72 = sphi 0, %s58
    %s76 = sphi 0, %s76
    %s78 = sphi 0, %s76
    %s79 = sphi 0, %s78
    %s93 = sphi 0, %s79
    %s99 = sphi 0, %s101
    %s102 = sphi 0, %s99
    %s103 = sphi 0, %s102
    %s119 = sphi 0, %s103
  $region4: #{total_loss.2} parent=0 // loop_header_branch
    %29 = sbr.rel (%p27) target = $region8
  $region5: #{total_loss.2} parent=0 // loop_body
    %s31 = ssub.s32 %s26, 1
    %s32 = ssub.s32 %s26, 2
    %s33 = sadd.s32 %s26, 1
    %s35 = sadd.s32 %s34, 1
    %p38 = scmp.eq.s32.totalorder %s26, 1
    %p39 = scmp.ne.s32.totalorder %s34, %s36
    %p40 = scmp.eq.s32.totalorder %s26, 0
    %p41 = por %p39, %p40
    %p42 = scmp.ne.s32.totalorder %s34, %s36
    %p43 = scmp.eq.s32.totalorder %s31, 1
    %p44 = por %p42, %p43
    %p45 = scmp.ne.s32.totalorder %s36, %s37
    %p46 = scmp.eq.s32.totalorder %s31, 0
    %p47 = por %p45, %p46
    %p48 = scmp.ne.s32.totalorder %s36, %s37
    %p49 = scmp.eq.s32.totalorder %s32, 1
    %p50 = por %p48, %p49
    %p52 = scmp.ne.s32.totalorder %s37, %s51
    %p53 = scmp.eq.s32.totalorder %s32, 0
    %p54 = por %p52, %p53
    %s56 = sadd.s32 %s55, 1
    %p59 = scmp.eq.s32.totalorder %s26, 1
    %p60 = scmp.ne.s32.totalorder %s55, %s57
    %p61 = scmp.eq.s32.totalorder %s26, 0
    %p62 = por %p60, %p61
    %p63 = scmp.ne.s32.totalorder %s55, %s57
    %p64 = scmp.eq.s32.totalorder %s31, 1
    %p65 = por %p63, %p64
    %p66 = scmp.ne.s32.totalorder %s57, %s58
    %p67 = scmp.eq.s32.totalorder %s31, 0
    %p68 = por %p66, %p67
    %p69 = scmp.ne.s32.totalorder %s57, %s58
    %p70 = scmp.eq.s32.totalorder %s32, 1
    %p71 = por %p69, %p70
    %p73 = scmp.ne.s32.totalorder %s58, %s72
    %p74 = scmp.eq.s32.totalorder %s32, 0
    %p75 = por %p73, %p74
    %s77 = sadd.s32 %s76, 1
    %p80 = scmp.eq.s32.totalorder %s26, 1
    %p81 = scmp.ne.s32.totalorder %s76, %s78
    %p82 = scmp.eq.s32.totalorder %s26, 0
    %p83 = por %p81, %p82
    %p84 = scmp.ne.s32.totalorder %s76, %s78
    %p85 = scmp.eq.s32.totalorder %s31, 1
    %p86 = por %p84, %p85
    %p87 = scmp.ne.s32.totalorder %s78, %s79
    %p88 = scmp.eq.s32.totalorder %s31, 0
    %p89 = por %p87, %p88
    %p90 = scmp.ne.s32.totalorder %s78, %s79
    %p91 = scmp.eq.s32.totalorder %s32, 1
    %p92 = por %p90, %p91
    %p94 = scmp.ne.s32.totalorder %s79, %s93
    %p95 = scmp.eq.s32.totalorder %s32, 0
    %p96 = por %p94, %p95
    %s97 = ssub.s32 %s26, %s33
    %p98 = scmp.eq.s32.totalorder %s97, 0
    %s100 = sadd.s32 %s99, 1
    %s101 = scalar_select %p98, %s99, %s100
    %p104 = pneg %p98
    %p105 = scmp.eq.s32.totalorder %s26, 1
    %p106 = por %p104, %p105
    %p107 = scmp.ne.s32.totalorder %s99, %s102
    %p108 = scmp.eq.s32.totalorder %s26, 0
    %p109 = por %p107, %p108
    %p110 = scmp.ne.s32.totalorder %s99, %s102
    %p111 = scmp.eq.s32.totalorder %s31, 1
    %p112 = por %p110, %p111
    %p113 = scmp.ne.s32.totalorder %s102, %s103
    %p114 = scmp.eq.s32.totalorder %s31, 0
    %p115 = por %p113, %p114
    %p116 = scmp.ne.s32.totalorder %s102, %s103
    %p117 = scmp.eq.s32.totalorder %s32, 1
    %p118 = por %p116, %p117
    %p120 = scmp.ne.s32.totalorder %s103, %s119
    %p121 = scmp.eq.s32.totalorder %s32, 0
    %p122 = por %p120, %p121
    %p123 = scmp.le.s32.totalorder 1, %s26
    %p124 = scmp.lt.s32.totalorder %s26, 3
    %p125 = pnand %p123, %p124
    %p126 = pneg %p125
    // Predicated region
    $region9: #{total_loss.2} parent=5 // pred_check
      _
    $region10: #{total_loss.2} parent=5 // pred_check_branch
      %128 = sbr.rel (%p125) target = $region12
    $region11: #{total_loss.2} parent=5 // pred_region
      %s129 = ssub.s32 %s26, 1
      // Predicated region
      $region13: #{total_loss.2} parent=11 // pred_check
        %p130 = pneg %p47
      $region14: #{total_loss.2} parent=11 // pred_check_branch
        %132 = sbr.rel (%p130) target = $region16
      $region15: #{total_loss.2} parent=11 // pred_region
        _
      $region16: #{total_loss.2} parent=11 // pred_fallthru
        _
      // Predicated region
      $region17: #{total_loss.2} parent=11 // pred_check
        %p133 = pneg %p68
      $region18: #{total_loss.2} parent=11 // pred_check_branch
        %135 = sbr.rel (%p133) target = $region20
      $region19: #{total_loss.2} parent=11 // pred_region
        _
      $region20: #{total_loss.2} parent=11 // pred_fallthru
        _
      // Predicated region
      $region21: #{total_loss.2} parent=11 // pred_check
        %p136 = pneg %p89
      $region22: #{total_loss.2} parent=11 // pred_check_branch
        %138 = sbr.rel (%p136) target = $region24
      $region23: #{total_loss.2} parent=11 // pred_region
        _
      $region24: #{total_loss.2} parent=11 // pred_fallthru
        _
    $region12: #{total_loss.2} parent=5 // pred_fallthru
      _
    %p139 = scmp.lt.s32.totalorder %s26, 2
    // Predicated region
    $region25: #{total_loss.2} parent=5 // pred_check
      %p140 = pneg %p139
    $region26: #{total_loss.2} parent=5 // pred_check_branch
      %142 = sbr.rel (%p140) target = $region28
    $region27: #{total_loss.2} parent=5 // pred_region
      _
    $region28: #{total_loss.2} parent=5 // pred_fallthru
      _
    %p143 = scmp.le.s32.totalorder 1, %s26
    %p144 = scmp.lt.s32.totalorder %s26, 3
    %p145 = pnand %p143, %p144
    %p146 = pneg %p145
    // Predicated region
    $region29: #{total_loss.2} parent=5 // pred_check
      _
    $region30: #{total_loss.2} parent=5 // pred_check_branch
      %148 = sbr.rel (%p145) target = $region32
    $region31: #{total_loss.2} parent=5 // pred_region
      %s149 = ssub.s32 %s26, 1
      %p150 = pneg %p47
      %p151 = pneg %p44
      %p152 = pneg %p68
      %p153 = pneg %p65
      %p154 = pneg %p89
      %p155 = pneg %p86
      %p156 = pneg %p115
      %p157 = pneg %p112
      %p158 = scmp.lt.s32.totalorder %s31, 1
      %s159 = scalar_select %p158, %s31, 1
      %s160 = smul.addr %s159, 2
      %s161 = scalar_lea.vmem %s6, %s160
      %p162 = scmp.lt.s32.totalorder %s31, 1
      %s163 = scalar_select %p162, %s31, 1
      %s164 = smul.addr %s163, 2
      %s165 = scalar_lea.vmem %s6, %s164
      %s166 = sld [smem:[#allocation3 + %s31]]
      %s167 = sld [smem:[#allocation4 + %s31]]
      %s168 = sld [smem:[#allocation5 + %s31]]
      %v169 = vld [vmem:[%s3] sm:$0xf]
      %v170 = vld [vmem:[%s3 + $0x4] sm:$0xf]
      %v171 = vlaneseq
      %v172 = vand.u32 %v171, 127
      %v173 = vstv %s166
      %vm174 = vcmp.ge.s32.totalorder %v172, %v173
      %s175 = sadd.s32 %s166, %s167
      %v176 = vstv %s175
      %vm177 = vcmp.lt.s32.totalorder %v172, %v176
      %vm178 = vmand %vm174, %vm177
      %v179 = vsel %vm178, 1, 0
      %v180 = vcvt.s32.f32 %v179
      %v181 = vld [vmem:[%s4] sm:$0x1]
      %v182 = vld [vmem:[%s4 + $0x1] sm:$0x1]
      %v183 = vmul.f32 %v181, %v180
      %v184 = vmul.f32 %v182, %v180
      %v187 = vlaneseq
      %v188 = vshrl.u32 %v187, 7
      %v189 = vsub.s32 0, %v188
      %v190 = vrot.slane %v183, %v189
      %v191 = vlaneseq
      %v192 = vshrl.u32 %v191, 7
      %v193 = vsub.s32 0, %v192
      %v194 = vrot.slane %v184, %v193
      %v197 = vmul.f32 %v169, %v190
      %v198 = vmul.f32 %v170, %v194
      %p199 = scmp.gt.s32.totalorder %s167, 1
      %s200 = scalar_select %p199, %s167, 1
      %s201 = scvt.s32.f32 %s200
      %p202 = scmp.gt.s32.totalorder %s168, 1
      %s203 = scalar_select %p202, %s168, 1
      %s204 = scvt.s32.f32 %s203
      %vm205 = vcmask 1043456
      %v206 = vsel %vm205, %v197, 0.0
      %207 = vadd.xlane.f32.xlu0 %v206
      %v208 = vpop.xlane.xlu0 %207
      %v209 = vsel %vm205, %v198, 0.0
      %210 = vadd.xlane.f32.xlu0 %v209
      %v211 = vpop.xlane.xlu0 %210
      %v212 = vstv %s201
      %v213 = vrcp.pop %v212
      %v214 = vmul.f32 %v208, %v213
      %v215 = vmul.f32 %v211, %v213
      %vm216 = vcmp.ge.f32.partialorder %v197, 0.5
      %vm217 = vcmp.ge.f32.partialorder %v198, 0.5
      %v218 = vsel %vm216, 1.0, 0.0
      %v219 = vsel %vm217, 1.0, 0.0
      %v220 = vsel %vm205, %v218, 0.0
      %221 = vadd.xlane.f32.xlu0 %v220
      %v222 = vpop.xlane.xlu0 %221
      %v223 = vsel %vm205, %v219, 0.0
      %224 = vadd.xlane.f32.xlu0 %v223
      %v225 = vpop.xlane.xlu0 %224
      %v226 = vstv %s204
      %vm227 = vcmp.ge.f32.partialorder %v222, %v226
      %vm228 = vcmp.ge.f32.partialorder %v225, %v226
      %v229 = vsel %vm227, 0.5, 0.0
      %v230 = vsel %vm228, 0.5, 0.0
      %v231 = vsel %vm227, 1.0, 0.5
      %v232 = vsel %vm228, 1.0, 0.5
      %v233 = vadd.f32 %v229, %v231
      %v234 = vadd.f32 %v230, %v232
      %v235 = vmul.f32 %v233, 0.5
      %v236 = vmul.f32 %v234, 0.5
      %vm237 = vcmp.ge.f32.partialorder %v197, %v235
      %vm238 = vcmp.ge.f32.partialorder %v198, %v236
      %v239 = vsel %vm237, 1.0, 0.0
      %v240 = vsel %vm238, 1.0, 0.0
      %v241 = vsel %vm205, %v239, 0.0
      %242 = vadd.xlane.f32.xlu0 %v241
      %v243 = vpop.xlane.xlu0 %242
      %v244 = vsel %vm205, %v240, 0.0
      %245 = vadd.xlane.f32.xlu0 %v244
      %v246 = vpop.xlane.xlu0 %245
      %vm247 = vcmp.ge.f32.partialorder %v243, %v226
      %vm248 = vcmp.ge.f32.partialorder %v246, %v226
      %v249 = vsel %vm247, %v235, %v229
      %v250 = vsel %vm248, %v236, %v230
      %v251 = vsel %vm247, %v231, %v235
      %v252 = vsel %vm248, %v232, %v236
      %v253 = vadd.f32 %v249, %v251
      %v254 = vadd.f32 %v250, %v252
      %v255 = vmul.f32 %v253, 0.5
      %v256 = vmul.f32 %v254, 0.5
      %vm257 = vcmp.ge.f32.partialorder %v197, %v255
      %vm258 = vcmp.ge.f32.partialorder %v198, %v256
      %v259 = vsel %vm257, 1.0, 0.0
      %v260 = vsel %vm258, 1.0, 0.0
      %v261 = vsel %vm205, %v259, 0.0
      %262 = vadd.xlane.f32.xlu0 %v261
      %v263 = vpop.xlane.xlu0 %262
      %v264 = vsel %vm205, %v260, 0.0
      %265 = vadd.xlane.f32.xlu0 %v264
      %v266 = vpop.xlane.xlu0 %265
      %vm267 = vcmp.ge.f32.partialorder %v263, %v226
      %vm268 = vcmp.ge.f32.partialorder %v266, %v226
      %v269 = vsel %vm267, %v255, %v249
      %v270 = vsel %vm268, %v256, %v250
      %v271 = vsel %vm267, %v251, %v255
      %v272 = vsel %vm268, %v252, %v256
      %v273 = vadd.f32 %v269, %v271
      %v274 = vadd.f32 %v270, %v272
      %v275 = vmul.f32 %v273, 0.5
      %v276 = vmul.f32 %v274, 0.5
      %vm277 = vcmp.ge.f32.partialorder %v197, %v275
      %vm278 = vcmp.ge.f32.partialorder %v198, %v276
      %v279 = vsel %vm277, 1.0, 0.0
      %v280 = vsel %vm278, 1.0, 0.0
      %v281 = vsel %vm205, %v279, 0.0
      %282 = vadd.xlane.f32.xlu0 %v281
      %v283 = vpop.xlane.xlu0 %282
      %v284 = vsel %vm205, %v280, 0.0
      %285 = vadd.xlane.f32.xlu0 %v284
      %v286 = vpop.xlane.xlu0 %285
      %vm287 = vcmp.ge.f32.partialorder %v283, %v226
      %vm288 = vcmp.ge.f32.partialorder %v286, %v226
      %v289 = vsel %vm287, %v275, %v269
      %v290 = vsel %vm288, %v276, %v270
      %v291 = vsel %vm287, %v271, %v275
      %v292 = vsel %vm288, %v272, %v276
      %v293 = vadd.f32 %v289, %v291
      %v294 = vadd.f32 %v290, %v292
      %v295 = vmul.f32 %v293, 0.5
      %v296 = vmul.f32 %v294, 0.5
      %vm297 = vcmp.ge.f32.partialorder %v197, %v295
      %vm298 = vcmp.ge.f32.partialorder %v198, %v296
      %v299 = vsel %vm297, 1.0, 0.0
      %v300 = vsel %vm298, 1.0, 0.0
      %v301 = vsel %vm205, %v299, 0.0
      %302 = vadd.xlane.f32.xlu0 %v301
      %v303 = vpop.xlane.xlu0 %302
      %v304 = vsel %vm205, %v300, 0.0
      %305 = vadd.xlane.f32.xlu0 %v304
      %v306 = vpop.xlane.xlu0 %305
      %vm307 = vcmp.ge.f32.partialorder %v303, %v226
      %vm308 = vcmp.ge.f32.partialorder %v306, %v226
      %v309 = vsel %vm307, %v295, %v289
      %v310 = vsel %vm308, %v296, %v290
      %v311 = vsel %vm307, %v291, %v295
      %v312 = vsel %vm308, %v292, %v296
      %v313 = vadd.f32 %v309, %v311
      %v314 = vadd.f32 %v310, %v312
      %v315 = vmul.f32 %v313, 0.5
      %v316 = vmul.f32 %v314, 0.5
      %vm317 = vcmp.ge.f32.partialorder %v197, %v315
      %vm318 = vcmp.ge.f32.partialorder %v198, %v316
      %v319 = vsel %vm317, 1.0, 0.0
      %v320 = vsel %vm318, 1.0, 0.0
      %v321 = vsel %vm205, %v319, 0.0
      %322 = vadd.xlane.f32.xlu0 %v321
      %v323 = vpop.xlane.xlu0 %322
      %v324 = vsel %vm205, %v320, 0.0
      %325 = vadd.xlane.f32.xlu0 %v324
      %v326 = vpop.xlane.xlu0 %325
      %vm327 = vcmp.ge.f32.partialorder %v323, %v226
      %vm328 = vcmp.ge.f32.partialorder %v326, %v226
      %v329 = vsel %vm327, %v315, %v309
      %v330 = vsel %vm328, %v316, %v310
      %v331 = vsel %vm327, %v311, %v315
      %v332 = vsel %vm328, %v312, %v316
      %v333 = vadd.f32 %v329, %v331
      %v334 = vadd.f32 %v330, %v332
      %v335 = vmul.f32 %v333, 0.5
      %v336 = vmul.f32 %v334, 0.5
      %vm337 = vcmp.ge.f32.partialorder %v197, %v335
      %vm338 = vcmp.ge.f32.partialorder %v198, %v336
      %v339 = vsel %vm337, 1.0, 0.0
      %v340 = vsel %vm338, 1.0, 0.0
      %v341 = vsel %vm205, %v339, 0.0
      %342 = vadd.xlane.f32.xlu0 %v341
      %v343 = vpop.xlane.xlu0 %342
      %v344 = vsel %vm205, %v340, 0.0
      %345 = vadd.xlane.f32.xlu0 %v344
      %v346 = vpop.xlane.xlu0 %345
      %vm347 = vcmp.ge.f32.partialorder %v343, %v226
      %vm348 = vcmp.ge.f32.partialorder %v346, %v226
      %v349 = vsel %vm347, %v335, %v329
      %v350 = vsel %vm348, %v336, %v330
      %v351 = vsel %vm347, %v331, %v335
      %v352 = vsel %vm348, %v332, %v336
      %v353 = vadd.f32 %v349, %v351
      %v354 = vadd.f32 %v350, %v352
      %v355 = vmul.f32 %v353, 0.5
      %v356 = vmul.f32 %v354, 0.5
      %vm357 = vcmp.ge.f32.partialorder %v197, %v355
      %vm358 = vcmp.ge.f32.partialorder %v198, %v356
      %v359 = vsel %vm357, 1.0, 0.0
      %v360 = vsel %vm358, 1.0, 0.0
      %v361 = vsel %vm205, %v359, 0.0
      %362 = vadd.xlane.f32.xlu0 %v361
      %v363 = vpop.xlane.xlu0 %362
      %v364 = vsel %vm205, %v360, 0.0
      %365 = vadd.xlane.f32.xlu0 %v364
      %v366 = vpop.xlane.xlu0 %365
      %vm367 = vcmp.ge.f32.partialorder %v363, %v226
      %vm368 = vcmp.ge.f32.partialorder %v366, %v226
      %v369 = vsel %vm367, %v355, %v349
      %v370 = vsel %vm368, %v356, %v350
      %v371 = vsel %vm367, %v351, %v355
      %v372 = vsel %vm368, %v352, %v356
      %v373 = vadd.f32 %v369, %v371
      %v374 = vadd.f32 %v370, %v372
      %v375 = vmul.f32 %v373, 0.5
      %v376 = vmul.f32 %v374, 0.5
      %vm377 = vcmp.ge.f32.partialorder %v197, %v375
      %vm378 = vcmp.ge.f32.partialorder %v198, %v376
      %v379 = vsel %vm377, 1.0, 0.0
      %v380 = vsel %vm378, 1.0, 0.0
      %v381 = vsel %vm205, %v379, 0.0
      %382 = vadd.xlane.f32.xlu0 %v381
      %v383 = vpop.xlane.xlu0 %382
      %v384 = vsel %vm205, %v380, 0.0
      %385 = vadd.xlane.f32.xlu0 %v384
      %v386 = vpop.xlane.xlu0 %385
      %vm387 = vcmp.ge.f32.partialorder %v383, %v226
      %vm388 = vcmp.ge.f32.partialorder %v386, %v226
      %v389 = vsel %vm387, %v375, %v369
      %v390 = vsel %vm388, %v376, %v370
      %v391 = vsel %vm387, %v371, %v375
      %v392 = vsel %vm388, %v372, %v376
      %v393 = vadd.f32 %v389, %v391
      %v394 = vadd.f32 %v390, %v392
      %v395 = vmul.f32 %v393, 0.5
      %v396 = vmul.f32 %v394, 0.5
      %vm397 = vcmp.ge.f32.partialorder %v197, %v395
      %vm398 = vcmp.ge.f32.partialorder %v198, %v396
      %v399 = vsel %vm397, 1.0, 0.0
      %v400 = vsel %vm398, 1.0, 0.0
      %v401 = vsel %vm205, %v399, 0.0
      %402 = vadd.xlane.f32.xlu0 %v401
      %v403 = vpop.xlane.xlu0 %402
      %v404 = vsel %vm205, %v400, 0.0
      %405 = vadd.xlane.f32.xlu0 %v404
      %v406 = vpop.xlane.xlu0 %405
      %vm407 = vcmp.ge.f32.partialorder %v403, %v226
      %vm408 = vcmp.ge.f32.partialorder %v406, %v226
      %v409 = vsel %vm407, %v395, %v389
      %v410 = vsel %vm408, %v396, %v390
      %v411 = vsel %vm407, %v391, %v395
      %v412 = vsel %vm408, %v392, %v396
      %v413 = vadd.f32 %v409, %v411
      %v414 = vadd.f32 %v410, %v412
      %v415 = vmul.f32 %v413, 0.5
      %v416 = vmul.f32 %v414, 0.5
      %vm417 = vcmp.ge.f32.partialorder %v197, %v415
      %vm418 = vcmp.ge.f32.partialorder %v198, %v416
      %v419 = vsel %vm417, 1.0, 0.0
      %v420 = vsel %vm418, 1.0, 0.0
      %v421 = vsel %vm205, %v419, 0.0
      %422 = vadd.xlane.f32.xlu0 %v421
      %v423 = vpop.xlane.xlu0 %422
      %v424 = vsel %vm205, %v420, 0.0
      %425 = vadd.xlane.f32.xlu0 %v424
      %v426 = vpop.xlane.xlu0 %425
      %vm427 = vcmp.ge.f32.partialorder %v423, %v226
      %vm428 = vcmp.ge.f32.partialorder %v426, %v226
      %v429 = vsel %vm427, %v415, %v409
      %v430 = vsel %vm428, %v416, %v410
      %v431 = vsel %vm427, %v411, %v415
      %v432 = vsel %vm428, %v412, %v416
      %v433 = vadd.f32 %v429, %v431
      %v434 = vadd.f32 %v430, %v432
      %v435 = vmul.f32 %v433, 0.5
      %v436 = vmul.f32 %v434, 0.5
      %vm437 = vcmp.ge.f32.partialorder %v197, %v435
      %vm438 = vcmp.ge.f32.partialorder %v198, %v436
      %v439 = vsel %vm437, 1.0, 0.0
      %v440 = vsel %vm438, 1.0, 0.0
      %v441 = vsel %vm205, %v439, 0.0
      %442 = vadd.xlane.f32.xlu0 %v441
      %v443 = vpop.xlane.xlu0 %442
      %v444 = vsel %vm205, %v440, 0.0
      %445 = vadd.xlane.f32.xlu0 %v444
      %v446 = vpop.xlane.xlu0 %445
      %vm447 = vcmp.ge.f32.partialorder %v443, %v226
      %vm448 = vcmp.ge.f32.partialorder %v446, %v226
      %v449 = vsel %vm447, %v435, %v429
      %v450 = vsel %vm448, %v436, %v430
      %v451 = vsel %vm447, %v431, %v435
      %v452 = vsel %vm448, %v432, %v436
      %v453 = vadd.f32 %v449, %v451
      %v454 = vadd.f32 %v450, %v452
      %v455 = vmul.f32 %v453, 0.5
      %v456 = vmul.f32 %v454, 0.5
      %vm457 = vcmp.ge.f32.partialorder %v197, %v455
      %vm458 = vcmp.ge.f32.partialorder %v198, %v456
      %v459 = vsel %vm457, 1.0, 0.0
      %v460 = vsel %vm458, 1.0, 0.0
      %v461 = vsel %vm205, %v459, 0.0
      %462 = vadd.xlane.f32.xlu0 %v461
      %v463 = vpop.xlane.xlu0 %462
      %v464 = vsel %vm205, %v460, 0.0
      %465 = vadd.xlane.f32.xlu0 %v464
      %v466 = vpop.xlane.xlu0 %465
      %vm467 = vcmp.ge.f32.partialorder %v463, %v226
      %vm468 = vcmp.ge.f32.partialorder %v466, %v226
      %v469 = vsel %vm467, %v455, %v449
      %v470 = vsel %vm468, %v456, %v450
      %v471 = vsel %vm467, %v451, %v455
      %v472 = vsel %vm468, %v452, %v456
      %v473 = vadd.f32 %v469, %v471
      %v474 = vadd.f32 %v470, %v472
      %v475 = vmul.f32 %v473, 0.5
      %v476 = vmul.f32 %v474, 0.5
      %vm477 = vcmp.ge.f32.partialorder %v197, %v475
      %vm478 = vcmp.ge.f32.partialorder %v198, %v476
      %v479 = vsel %vm477, 1.0, 0.0
      %v480 = vsel %vm478, 1.0, 0.0
      %v481 = vsel %vm205, %v479, 0.0
      %482 = vadd.xlane.f32.xlu0 %v481
      %v483 = vpop.xlane.xlu0 %482
      %v484 = vsel %vm205, %v480, 0.0
      %485 = vadd.xlane.f32.xlu0 %v484
      %v486 = vpop.xlane.xlu0 %485
      %vm487 = vcmp.ge.f32.partialorder %v483, %v226
      %vm488 = vcmp.ge.f32.partialorder %v486, %v226
      %v489 = vsel %vm487, %v475, %v469
      %v490 = vsel %vm488, %v476, %v470
      %v491 = vsel %vm487, %v471, %v475
      %v492 = vsel %vm488, %v472, %v476
      %v493 = vadd.f32 %v489, %v491
      %v494 = vadd.f32 %v490, %v492
      %v495 = vmul.f32 %v493, 0.5
      %v496 = vmul.f32 %v494, 0.5
      %vm497 = vcmp.ge.f32.partialorder %v197, %v495
      %vm498 = vcmp.ge.f32.partialorder %v198, %v496
      %v499 = vsel %vm497, 1.0, 0.0
      %v500 = vsel %vm498, 1.0, 0.0
      %v501 = vsel %vm205, %v499, 0.0
      %502 = vadd.xlane.f32.xlu0 %v501
      %v503 = vpop.xlane.xlu0 %502
      %v504 = vsel %vm205, %v500, 0.0
      %505 = vadd.xlane.f32.xlu0 %v504
      %v506 = vpop.xlane.xlu0 %505
      %vm507 = vcmp.ge.f32.partialorder %v503, %v226
      %vm508 = vcmp.ge.f32.partialorder %v506, %v226
      %v509 = vsel %vm507, %v495, %v489
      %v510 = vsel %vm508, %v496, %v490
      %v511 = vsel %vm507, %v491, %v495
      %v512 = vsel %vm508, %v492, %v496
      %v513 = vadd.f32 %v509, %v511
      %v514 = vadd.f32 %v510, %v512
      %v515 = vmul.f32 %v513, 0.5
      %v516 = vmul.f32 %v514, 0.5
      %vm517 = vcmp.ge.f32.partialorder %v197, %v515
      %vm518 = vcmp.ge.f32.partialorder %v198, %v516
      %v519 = vsel %vm517, 1.0, 0.0
      %v520 = vsel %vm518, 1.0, 0.0
      %v521 = vsel %vm205, %v519, 0.0
      %522 = vadd.xlane.f32.xlu0 %v521
      %v523 = vpop.xlane.xlu0 %522
      %v524 = vsel %vm205, %v520, 0.0
      %525 = vadd.xlane.f32.xlu0 %v524
      %v526 = vpop.xlane.xlu0 %525
      %vm527 = vcmp.ge.f32.partialorder %v523, %v226
      %vm528 = vcmp.ge.f32.partialorder %v526, %v226
      %v529 = vsel %vm527, %v515, %v509
      %v530 = vsel %vm528, %v516, %v510
      %v531 = vsel %vm527, %v511, %v515
      %v532 = vsel %vm528, %v512, %v516
      %v533 = vadd.f32 %v529, %v531
      %v534 = vadd.f32 %v530, %v532
      %v535 = vmul.f32 %v533, 0.5
      %v536 = vmul.f32 %v534, 0.5
      %vm537 = vcmp.ge.f32.partialorder %v197, %v535
      %vm538 = vcmp.ge.f32.partialorder %v198, %v536
      %v539 = vsel %vm537, 1.0, 0.0
      %v540 = vsel %vm538, 1.0, 0.0
      %v541 = vsel %vm205, %v539, 0.0
      %542 = vadd.xlane.f32.xlu0 %v541
      %v543 = vpop.xlane.xlu0 %542
      %v544 = vsel %vm205, %v540, 0.0
      %545 = vadd.xlane.f32.xlu0 %v544
      %v546 = vpop.xlane.xlu0 %545
      %vm547 = vcmp.ge.f32.partialorder %v543, %v226
      %vm548 = vcmp.ge.f32.partialorder %v546, %v226
      %v549 = vsel %vm547, %v535, %v529
      %v550 = vsel %vm548, %v536, %v530
      %v551 = vsel %vm547, %v531, %v535
      %v552 = vsel %vm548, %v532, %v536
      %v553 = vadd.f32 %v549, %v551
      %v554 = vadd.f32 %v550, %v552
      %v555 = vmul.f32 %v553, 0.5
      %v556 = vmul.f32 %v554, 0.5
      %vm557 = vcmp.ge.f32.partialorder %v197, %v555
      %vm558 = vcmp.ge.f32.partialorder %v198, %v556
      %v559 = vsel %vm557, 1.0, 0.0
      %v560 = vsel %vm558, 1.0, 0.0
      %v561 = vsel %vm205, %v559, 0.0
      %562 = vadd.xlane.f32.xlu0 %v561
      %v563 = vpop.xlane.xlu0 %562
      %v564 = vsel %vm205, %v560, 0.0
      %565 = vadd.xlane.f32.xlu0 %v564
      %v566 = vpop.xlane.xlu0 %565
      %vm567 = vcmp.ge.f32.partialorder %v563, %v226
      %vm568 = vcmp.ge.f32.partialorder %v566, %v226
      %v569 = vsel %vm567, %v555, %v549
      %v570 = vsel %vm568, %v556, %v550
      %v571 = vsel %vm567, %v551, %v555
      %v572 = vsel %vm568, %v552, %v556
      %v573 = vadd.f32 %v569, %v571
      %v574 = vadd.f32 %v570, %v572
      %v575 = vmul.f32 %v573, 0.5
      %v576 = vmul.f32 %v574, 0.5
      %vm577 = vcmp.ge.f32.partialorder %v197, %v575
      %vm578 = vcmp.ge.f32.partialorder %v198, %v576
      %v579 = vsel %vm577, 1.0, 0.0
      %v580 = vsel %vm578, 1.0, 0.0
      %v581 = vsel %vm205, %v579, 0.0
      %582 = vadd.xlane.f32.xlu0 %v581
      %v583 = vpop.xlane.xlu0 %582
      %v584 = vsel %vm205, %v580, 0.0
      %585 = vadd.xlane.f32.xlu0 %v584
      %v586 = vpop.xlane.xlu0 %585
      %vm587 = vcmp.ge.f32.partialorder %v583, %v226
      %vm588 = vcmp.ge.f32.partialorder %v586, %v226
      %v589 = vsel %vm587, %v575, %v569
      %v590 = vsel %vm588, %v576, %v570
      %v591 = vsel %vm587, %v571, %v575
      %v592 = vsel %vm588, %v572, %v576
      %v593 = vadd.f32 %v589, %v591
      %v594 = vadd.f32 %v590, %v592
      %v595 = vmul.f32 %v593, 0.5
      %v596 = vmul.f32 %v594, 0.5
      %vm597 = vcmp.ge.f32.partialorder %v197, %v595
      %vm598 = vcmp.ge.f32.partialorder %v198, %v596
      %v599 = vsel %vm597, 1.0, 0.0
      %v600 = vsel %vm598, 1.0, 0.0
      %v601 = vsel %vm205, %v599, 0.0
      %602 = vadd.xlane.f32.xlu0 %v601
      %v603 = vpop.xlane.xlu0 %602
      %v604 = vsel %vm205, %v600, 0.0
      %605 = vadd.xlane.f32.xlu0 %v604
      %v606 = vpop.xlane.xlu0 %605
      %vm607 = vcmp.ge.f32.partialorder %v603, %v226
      %vm608 = vcmp.ge.f32.partialorder %v606, %v226
      %v609 = vsel %vm607, %v595, %v589
      %v610 = vsel %vm608, %v596, %v590
      %v611 = vsel %vm607, %v591, %v595
      %v612 = vsel %vm608, %v592, %v596
      %v613 = vadd.f32 %v609, %v611
      %v614 = vadd.f32 %v610, %v612
      %v615 = vmul.f32 %v613, 0.5
      %v616 = vmul.f32 %v614, 0.5
      %vm617 = vcmp.ge.f32.partialorder %v197, %v615
      %vm618 = vcmp.ge.f32.partialorder %v198, %v616
      %v619 = vsel %vm617, 1.0, 0.0
      %v620 = vsel %vm618, 1.0, 0.0
      %v621 = vsel %vm205, %v619, 0.0
      %622 = vadd.xlane.f32.xlu0 %v621
      %v623 = vpop.xlane.xlu0 %622
      %v624 = vsel %vm205, %v620, 0.0
      %625 = vadd.xlane.f32.xlu0 %v624
      %v626 = vpop.xlane.xlu0 %625
      %vm627 = vcmp.ge.f32.partialorder %v623, %v226
      %vm628 = vcmp.ge.f32.partialorder %v626, %v226
      %v629 = vsel %vm627, %v615, %v609
      %v630 = vsel %vm628, %v616, %v610
      %v631 = vsel %vm627, %v611, %v615
      %v632 = vsel %vm628, %v612, %v616
      %v633 = vadd.f32 %v629, %v631
      %v634 = vadd.f32 %v630, %v632
      %v635 = vmul.f32 %v633, 0.5
      %v636 = vmul.f32 %v634, 0.5
      %vm637 = vcmp.ge.f32.partialorder %v197, %v635
      %vm638 = vcmp.ge.f32.partialorder %v198, %v636
      %v639 = vsel %vm637, 1.0, 0.0
      %v640 = vsel %vm638, 1.0, 0.0
      %v641 = vsel %vm205, %v639, 0.0
      %642 = vadd.xlane.f32.xlu0 %v641
      %v643 = vpop.xlane.xlu0 %642
      %v644 = vsel %vm205, %v640, 0.0
      %645 = vadd.xlane.f32.xlu0 %v644
      %v646 = vpop.xlane.xlu0 %645
      %vm647 = vcmp.ge.f32.partialorder %v643, %v226
      %vm648 = vcmp.ge.f32.partialorder %v646, %v226
      %v649 = vsel %vm647, %v635, %v629
      %v650 = vsel %vm648, %v636, %v630
      %v651 = vsel %vm647, %v631, %v635
      %v652 = vsel %vm648, %v632, %v636
      %v653 = vadd.f32 %v649, %v651
      %v654 = vadd.f32 %v650, %v652
      %v655 = vmul.f32 %v653, 0.5
      %v656 = vmul.f32 %v654, 0.5
      %vm657 = vcmp.ge.f32.partialorder %v197, %v655
      %vm658 = vcmp.ge.f32.partialorder %v198, %v656
      %v659 = vsel %vm657, 1.0, 0.0
      %v660 = vsel %vm658, 1.0, 0.0
      %v661 = vsel %vm205, %v659, 0.0
      %662 = vadd.xlane.f32.xlu0 %v661
      %v663 = vpop.xlane.xlu0 %662
      %v664 = vsel %vm205, %v660, 0.0
      %665 = vadd.xlane.f32.xlu0 %v664
      %v666 = vpop.xlane.xlu0 %665
      %vm667 = vcmp.ge.f32.partialorder %v663, %v226
      %vm668 = vcmp.ge.f32.partialorder %v666, %v226
      %v669 = vsel %vm667, %v655, %v649
      %v670 = vsel %vm668, %v656, %v650
      %v671 = vsel %vm667, %v651, %v655
      %v672 = vsel %vm668, %v652, %v656
      %v673 = vadd.f32 %v669, %v671
      %v674 = vadd.f32 %v670, %v672
      %v675 = vmul.f32 %v673, 0.5
      %v676 = vmul.f32 %v674, 0.5
      %vm677 = vcmp.ge.f32.partialorder %v197, %v675
      %vm678 = vcmp.ge.f32.partialorder %v198, %v676
      %v679 = vsel %vm677, 1.0, 0.0
      %v680 = vsel %vm678, 1.0, 0.0
      %v681 = vsel %vm205, %v679, 0.0
      %682 = vadd.xlane.f32.xlu0 %v681
      %v683 = vpop.xlane.xlu0 %682
      %v684 = vsel %vm205, %v680, 0.0
      %685 = vadd.xlane.f32.xlu0 %v684
      %v686 = vpop.xlane.xlu0 %685
      %vm687 = vcmp.ge.f32.partialorder %v683, %v226
      %vm688 = vcmp.ge.f32.partialorder %v686, %v226
      %v689 = vsel %vm687, %v675, %v669
      %v690 = vsel %vm688, %v676, %v670
      %v691 = vsel %vm687, %v671, %v675
      %v692 = vsel %vm688, %v672, %v676
      %v693 = vadd.f32 %v689, %v691
      %v694 = vadd.f32 %v690, %v692
      %v695 = vmul.f32 %v693, 0.5
      %v696 = vmul.f32 %v694, 0.5
      %vm697 = vcmp.ge.f32.partialorder %v197, %v695
      %vm698 = vcmp.ge.f32.partialorder %v198, %v696
      %v699 = vsel %vm697, 1.0, 0.0
      %v700 = vsel %vm698, 1.0, 0.0
      %v701 = vsel %vm205, %v699, 0.0
      %702 = vadd.xlane.f32.xlu0 %v701
      %v703 = vpop.xlane.xlu0 %702
      %v704 = vsel %vm205, %v700, 0.0
      %705 = vadd.xlane.f32.xlu0 %v704
      %v706 = vpop.xlane.xlu0 %705
      %vm707 = vcmp.ge.f32.partialorder %v703, %v226
      %vm708 = vcmp.ge.f32.partialorder %v706, %v226
      %v709 = vsel %vm707, %v695, %v689
      %v710 = vsel %vm708, %v696, %v690
      %v711 = vsel %vm707, %v691, %v695
      %v712 = vsel %vm708, %v692, %v696
      %v713 = vadd.f32 %v709, %v711
      %v714 = vadd.f32 %v710, %v712
      %v715 = vmul.f32 %v713, 0.5
      %v716 = vmul.f32 %v714, 0.5
      %vm717 = vcmp.ge.f32.partialorder %v197, %v715
      %vm718 = vcmp.ge.f32.partialorder %v198, %v716
      %v719 = vsel %vm717, 1.0, 0.0
      %v720 = vsel %vm718, 1.0, 0.0
      %v721 = vsel %vm205, %v719, 0.0
      %722 = vadd.xlane.f32.xlu0 %v721
      %v723 = vpop.xlane.xlu0 %722
      %v724 = vsel %vm205, %v720, 0.0
      %725 = vadd.xlane.f32.xlu0 %v724
      %v726 = vpop.xlane.xlu0 %725
      %vm727 = vcmp.ge.f32.partialorder %v723, %v226
      %vm728 = vcmp.ge.f32.partialorder %v726, %v226
      %v729 = vsel %vm727, %v715, %v709
      %v730 = vsel %vm728, %v716, %v710
      %vm731 = vcmp.gt.f32.partialorder %v197, %v729
      %vm732 = vcmp.gt.f32.partialorder %v198, %v730
      %v733 = vsel %vm731, 1.0, 0.0
      %v734 = vsel %vm732, 1.0, 0.0
      %v735 = vsel %vm205, %v733, 0.0
      %736 = vadd.xlane.f32.xlu0 %v735
      %v737 = vpop.xlane.xlu0 %736
      %v738 = vsel %vm205, %v734, 0.0
      %739 = vadd.xlane.f32.xlu0 %v738
      %v740 = vpop.xlane.xlu0 %739
      %v741 = vmul.f32 %v197, %v733
      %v742 = vmul.f32 %v198, %v734
      %v743 = vsel %vm205, %v741, 0.0
      %744 = vadd.xlane.f32.xlu0 %v743
      %v745 = vpop.xlane.xlu0 %744
      %v746 = vsel %vm205, %v742, 0.0
      %747 = vadd.xlane.f32.xlu0 %v746
      %v748 = vpop.xlane.xlu0 %747
      %v749 = vsub.f32 %v226, %v737
      %v750 = vsub.f32 %v226, %v740
      %v751 = vmul.f32 %v749, %v729
      %v752 = vmul.f32 %v750, %v730
      %v753 = vadd.f32 %v745, %v751
      %v754 = vadd.f32 %v748, %v752
      %v755 = vrcp.pop %v226
      %v756 = vmul.f32 %v753, %v755
      %v757 = vmul.f32 %v754, %v755
      %v758 = vld [vmem:[%s5] sm:$0x3]
      %v760 = vlaneseq
      %v761 = vshrl.u32 %v760, 7
      %v762 = vsub.s32 0, %v761
      %v763 = vrot.slane %v758, %v762
      %765 = vbcast.lane.b32.xlu0 %v763, 256
      %v766 = vpop.permute.xlu0 %765
      %v767 = vlaneseq
      %v768 = vshrl.u32 %v767, 7
      %v769 = vsub.s32 1, %v768
      %v770 = vrot.slane %v758, %v769
      %772 = vbcast.lane.b32.xlu0 %v770, 256
      %v773 = vpop.permute.xlu0 %772
      %v776 = vmul.f32 %v756, %v766
      %v777 = vmul.f32 %v757, %v773
      %v778 = vsub.f32 1.0, %v758
      %v780 = vlaneseq
      %v781 = vshrl.u32 %v780, 7
      %v782 = vsub.s32 0, %v781
      %v783 = vrot.slane %v778, %v782
      %785 = vbcast.lane.b32.xlu0 %v783, 256
      %v786 = vpop.permute.xlu0 %785
      %v787 = vlaneseq
      %v788 = vshrl.u32 %v787, 7
      %v789 = vsub.s32 1, %v788
      %v790 = vrot.slane %v778, %v789
      %792 = vbcast.lane.b32.xlu0 %v790, 256
      %v793 = vpop.permute.xlu0 %792
      %v796 = vmul.f32 %v214, %v786
      %v797 = vmul.f32 %v215, %v793
      %v798 = vadd.f32 %v776, %v796
      %v799 = vadd.f32 %v777, %v797
      %802 = vset.pattern.permute.xlu0 0
      %803 = vperm.xlu0 %802, %v798
      %v804 = vpop.permute.xlu0 %803
      %805 = vset.pattern.permute.xlu0 0
      %806 = vperm.xlu0 %805, %v799
      %v807 = vpop.permute.xlu0 %806
      %v808 = vlaneseq
      %v809 = vshrl.u32 %v808, 7
      %v810 = vsub.s32 %v172, %v809
      %v811 = vrot.slane %v804, %v810
      %v812 = vlaneseq
      %v813 = vshrl.u32 %v812, 7
      %v814 = vsub.s32 %v172, %v813
      %v815 = vrot.slane %v807, %v814
      %vm816 = vcmask 1041409
      %v817 = vsel %vm816, %v815, %v811
      %vm819 = vcmask 25600
      %820 = vst.msk [vmem:[%s165] sm:$0x3] %vm819, %v817
      %p821 = scmp.lt.s32.totalorder %s31, 1
      %s822 = scalar_select %p821, %s31, 1
      %s823 = smul.addr %s822, 2
      %s824 = scalar_lea.vmem %s6, %s823
      // Predicated region
      $region33: #{total_loss.2} parent=31 // pred_check
        %p825 = pneg %p112
      $region34: #{total_loss.2} parent=31 // pred_check_branch
        %827 = sbr.rel (%p825) target = $region36
      $region35: #{total_loss.2} parent=31 // pred_region
        _
      $region36: #{total_loss.2} parent=31 // pred_fallthru
        _
    $region32: #{total_loss.2} parent=5 // pred_fallthru
      _
    %p828 = scmp.le.s32.totalorder 2, %s26
    // Predicated region
    $region37: #{total_loss.2} parent=5 // pred_check
      %p829 = pneg %p828
    $region38: #{total_loss.2} parent=5 // pred_check_branch
      %831 = sbr.rel (%p829) target = $region40
    $region39: #{total_loss.2} parent=5 // pred_region
      %s832 = ssub.s32 %s26, 2
      // Predicated region
      $region41: #{total_loss.2} parent=39 // pred_check
        %p833 = pneg %p118
      $region42: #{total_loss.2} parent=39 // pred_check_branch
        %835 = sbr.rel (%p833) target = $region44
      $region43: #{total_loss.2} parent=39 // pred_region
        %p836 = scmp.lt.s32.totalorder %s32, 1
        %s837 = scalar_select %p836, %s32, 1
        %s838 = smul.addr %s837, 2
        %s839 = scalar_lea.vmem %s6, %s838
      $region44: #{total_loss.2} parent=39 // pred_fallthru
        _
    $region40: #{total_loss.2} parent=5 // pred_fallthru
      _
  $region6: #{total_loss.2} parent=0 // loop_footer
    %s30 = sadd.s32 1, %s26
  $region7: #{total_loss.2} parent=0 // loop_footer_branch
    %25 = sbr.rel target = $region3
  $region8: #{total_loss.2} parent=0 // loop_exit
    _

</llo_original>
